<compile_context>
chip_gen: v7x
topology: tpu7x:2x2x1
jax: 0.10.0
libtpu: 0.0.40
codegen_flags: <defaults>
</compile_context>

<pallas_src>
import jax
import jax.numpy as jnp
from jax.experimental import pallas as pl
from jax.experimental.pallas import tpu as pltpu

BN_EPS = 1e-5     # PyTorch BatchNorm1d default eps
_SUBLANE = 8      # fp32 sublane quantum


# ---------------------------------------------------------------------------
# Fused kernel body
# ---------------------------------------------------------------------------
def _mlp_block(x_f32, w1, gamma, beta, w2, b2, mask_scaled):
    """Linear(no bias, bf16 MXU) -> BatchNorm1d (masked fp32 batch stats) -> ReLU -> Linear(+bias).

    mask_scaled has shape (M_pad, 1) with value 1/B on valid rows and 0 on padded rows, so
    sum(h * mask_scaled) == mean over the *real* batch and padded rows never contaminate stats.
    """
    h = jnp.dot(x_f32.astype(w1.dtype), w1, preferred_element_type=jnp.float32)

    # One masked multiply feeds both axis-0 (XLU) reductions, issued back-to-back.
    hm = h * mask_scaled
    mean = jnp.sum(hm, axis=0, keepdims=True)
    e2 = jnp.sum(hm * h, axis=0, keepdims=True)
    var = jnp.maximum(e2 - mean * mean, 0.0)          # clamp one-pass cancellation
    inv = jax.lax.rsqrt(var + BN_EPS)
    hn = (h - mean) * (inv * gamma) + beta            # fp32 elementwise (v5e-safe)

    hr = jnp.maximum(hn, 0.0)                         # ReLU
    return jnp.dot(hr.astype(w2.dtype), w2,
                   preferred_element_type=jnp.float32) + b2


def _siamese_fused_kernel(
    mask_ref, x_ref, ew_ref,
    pw1_ref, pg_ref, pb_ref, pw2_ref, pb2_ref,      # projector params
    qw1_ref, qg_ref, qb_ref, qw2_ref, qb2_ref,      # predictor params
    y_ref, z_ref, h_ref,
):
    mask = mask_ref[...]                                          # (M_pad, 1) fp32

    # Encoder: y = flatten(x) @ W_enc  (x already bf16, cast done in the wrapper)
    y = jnp.dot(x_ref[...], ew_ref[...], preferred_element_type=jnp.float32)
    y_ref[...] = y.astype(y_ref.dtype)

    # Projector MLP; z stays in registers/VMEM — no HBM round-trip before the predictor.
    z = _mlp_block(y, pw1_ref[...], pg_ref[...], pb_ref[...], pw2_ref[...], pb2_ref[...], mask)
    z_ref[...] = z.astype(z_ref.dtype)

    # Predictor MLP.
    h = _mlp_block(z, qw1_ref[...], qg_ref[...], qb_ref[...], qw2_ref[...], qb2_ref[...], mask)
    h_ref[...] = h.astype(h_ref.dtype)


# ---------------------------------------------------------------------------
# Wrapper: one pallas_call, no grid, whole operands resident in VMEM
# ---------------------------------------------------------------------------
def siamese_arm_pallas(x_flat_bf16, mask_scaled, enc_w, proj_params, pred_params,
                       out_dtype=jnp.float32):
    Mp, flat = x_flat_bf16.shape
    feat = enc_w.shape[1]
    p_hid, p_out = proj_params[0].shape[1], proj_params[3].shape[1]
    q_hid, q_out = pred_params[0].shape[1], pred_params[3].shape[1]

    args = (mask_scaled, x_flat_bf16, enc_w, *proj_params, *pred_params)

    flops = 2 * Mp * (flat * feat + feat * p_hid + p_hid * p_out
                      + p_out * q_hid + q_hid * q_out)
    out_itemsize = jnp.dtype(out_dtype).itemsize
    out_bytes = out_itemsize * Mp * (feat + p_out + q_out)
    in_bytes = sum(int(a.size) * a.dtype.itemsize for a in args)

    # VMEM budget: operands + outputs + fp32 activation working set, x2 slack + headroom,
    # capped safely below v7x's 64 MiB physical VMEM per TensorCore.
    act_bytes = 4 * Mp * (feat + p_hid + p_out + q_hid + q_out)
    vmem_limit = min(2 * (in_bytes + out_bytes + act_bytes) + (16 << 20), 48 << 20)

    vmem = pl.BlockSpec(memory_space=pltpu.MemorySpace.VMEM)

    return pl.pallas_call(
        _siamese_fused_kernel,
        out_shape=(
            jax.ShapeDtypeStruct((Mp, feat), out_dtype),
            jax.ShapeDtypeStruct((Mp, p_out), out_dtype),
            jax.ShapeDtypeStruct((Mp, q_out), out_dtype),
        ),
        in_specs=[vmem] * len(args),
        out_specs=(vmem, vmem, vmem),
        cost_estimate=pl.CostEstimate(
            flops=int(flops),
            transcendentals=int(p_hid + q_hid),          # two rsqrt rows
            bytes_accessed=int(in_bytes + out_bytes)),
        compiler_params=pltpu.CompilerParams(vmem_limit_bytes=int(vmem_limit)),
    )(*args)


def siamese_arm_forward(x_nchw, enc_w, proj_params, pred_params, out_dtype=jnp.float32):
    B = x_nchw.shape[0]
    # Flatten (matches y.view(y.size(0), -1), row-major) and cast to bf16 in the wrapper so the
    # activation DMA into VMEM is half the bytes.
    x_flat = x_nchw.reshape(B, -1).astype(jnp.bfloat16)

    # Pad batch to the sublane quantum so MXU rows / sublanes / stores are fully utilized.
    # TODO(synk): at real scale, fuse BYOL's two augmented views (and a larger microbatch) here
    #             so M >= 128/256 instead of just padding to 8.
    Mp = max(_SUBLANE, ((B + _SUBLANE - 1) // _SUBLANE) * _SUBLANE)
    if Mp != B:
        x_flat = jnp.pad(x_flat, ((0, Mp - B), (0, 0)))

    # Per-row mask with the 1/B BN normalizer folded in; padded rows contribute 0 to stats.
    mask_scaled = ((jnp.arange(Mp) < B).astype(jnp.float32) / jnp.float32(B)).reshape(Mp, 1)

    y, z, h = siamese_arm_pallas(x_flat, mask_scaled, enc_w, proj_params, pred_params, out_dtype)
    return y[:B], z[:B], h[:B]


# ---------------------------------------------------------------------------
# Pure-JAX reference (same bf16-at-the-dot / fp32-stats recipe, unpadded, two-pass variance)
# ---------------------------------------------------------------------------
def _reference_forward(x_nchw, enc_w, proj_params, pred_params):
    B = x_nchw.shape[0]
    x = x_nchw.reshape(B, -1).astype(jnp.bfloat16)
    y = jnp.dot(x, enc_w, preferred_element_type=jnp.float32)

    def mlp(a, params):
        w1, g, b, w2, b2 = params
        hh = jnp.dot(a.astype(w1.dtype), w1, preferred_element_type=jnp.float32)
        mean = jnp.mean(hh, axis=0, keepdims=True)
        var = jnp.mean((hh - mean) ** 2, axis=0, keepdims=True)
        hn = (hh - mean) * jax.lax.rsqrt(var + BN_EPS) * g + b
        hr = jnp.maximum(hn, 0.0)
        return jnp.dot(hr.astype(w2.dtype), w2, preferred_element_type=jnp.float32) + b2

    z = mlp(y, proj_params)
    h = mlp(z, pred_params)
    return y, z, h


# ---------------------------------------------------------------------------
# Deterministic parameter construction (PyTorch-style uniform(-1/sqrt(fan_in), +))
# ---------------------------------------------------------------------------
def _uniform(key, shape, fan_in):
    bound = 1.0 / jnp.sqrt(jnp.float32(fan_in))
    return jax.random.uniform(key, shape, jnp.float32, -bound, bound)


def make_mlp_params(key, input_dim, hidden_size, output_dim):
    k1, k2, k3 = jax.random.split(key, 3)
    w1 = _uniform(k1, (input_dim, hidden_size), input_dim).astype(jnp.bfloat16)  # Linear (no bias)
    gamma = jnp.ones((1, hidden_size), jnp.float32)                              # BN weight init
    beta = jnp.zeros((1, hidden_size), jnp.float32)                              # BN bias init
    w2 = _uniform(k2, (hidden_size, output_dim), hidden_size).astype(jnp.bfloat16)
    b2 = _uniform(k3, (1, output_dim), hidden_size)                              # fp32 bias
    return (w1, gamma, beta, w2, b2)


# ---------------------------------------------------------------------------
if __name__ == "__main__":
    key = jax.random.PRNGKey(0)
    kx, ke, kp, kq = jax.random.split(key, 4)

    # Small shapes consistent with the module structure; feature dims are multiples of 128
    # so all matmul operands / outputs are lane-dense.
    B, C, Himg, Wimg = 2, 4, 16, 16        # x: [2, 4, 16, 16] NCHW
    FLAT = C * Himg * Wimg                 # 1024
    FEAT = 128                             # encoder feature dim (stands in for 2048)
    PROJ_HID, PROJ_OUT = 256, 128          # projector MLP dims (stand in for 4096, 256)
    PRED_HID, PRED_OUT = 256, 128          # predictor MLP (input_dim = PROJ_OUT)

    x = jax.random.normal(kx, (B, C, Himg, Wimg), jnp.float32)
    enc_w = _uniform(ke, (FLAT, FEAT), FLAT).astype(jnp.bfloat16)
    proj_params = make_mlp_params(kp, FEAT, PROJ_HID, PROJ_OUT)
    pred_params = make_mlp_params(kq, PROJ_OUT, PRED_HID, PRED_OUT)

    y, z, h = jax.jit(siamese_arm_forward)(x, enc_w, proj_params, pred_params)
    jax.block_until_ready((y, z, h))

    assert y.shape == (B, FEAT)
    assert z.shape == (B, PROJ_OUT)
    assert h.shape == (B, PRED_OUT)
    assert jnp.all(jnp.isfinite(y)) and jnp.all(jnp.isfinite(z)) and jnp.all(jnp.isfinite(h))

    # Value check against the pure-JAX reference (bf16 matmuls, so ~1e-2-level tolerance).
    yr, zr, hr = jax.jit(_reference_forward)(x, enc_w, proj_params, pred_params)
    jax.block_until_ready((yr, zr, hr))
    assert jnp.allclose(y, yr, rtol=3e-2, atol=3e-2)
    assert jnp.allclose(z, zr, rtol=3e-2, atol=3e-2)
    assert jnp.allclose(h, hr, rtol=3e-2, atol=3e-2)

    print("KERNEL_OK")
</pallas_src>

<mosaic_0001>
module attributes {stable_mosaic.version = 11 : i64} {
  func.func @_siamese_fused_kernel(%arg0: memref<8x1xf32, #tpu.memory_space<vmem>>, %arg1: memref<8x1024xbf16, #tpu.memory_space<vmem>>, %arg2: memref<1024x128xbf16, #tpu.memory_space<vmem>>, %arg3: memref<128x256xbf16, #tpu.memory_space<vmem>>, %arg4: memref<1x256xf32, #tpu.memory_space<vmem>>, %arg5: memref<1x256xf32, #tpu.memory_space<vmem>>, %arg6: memref<256x128xbf16, #tpu.memory_space<vmem>>, %arg7: memref<1x128xf32, #tpu.memory_space<vmem>>, %arg8: memref<128x256xbf16, #tpu.memory_space<vmem>>, %arg9: memref<1x256xf32, #tpu.memory_space<vmem>>, %arg10: memref<1x256xf32, #tpu.memory_space<vmem>>, %arg11: memref<256x128xbf16, #tpu.memory_space<vmem>>, %arg12: memref<1x128xf32, #tpu.memory_space<vmem>>, %arg13: memref<8x128xf32, #tpu.memory_space<vmem>>, %arg14: memref<8x128xf32, #tpu.memory_space<vmem>>, %arg15: memref<8x128xf32, #tpu.memory_space<vmem>>) attributes {dimension_semantics = [], scalar_prefetch = 0 : i64, scratch_operands = 0 : i64, tpu.core_type = #tpu.core_type<tc>} {
    %c0 = arith.constant 0 : index
    %c0_0 = arith.constant 0 : index
    %0 = vector.load %arg0[%c0, %c0_0] : memref<8x1xf32, #tpu.memory_space<vmem>>, vector<8x1xf32>
    %c0_1 = arith.constant 0 : index
    %c0_2 = arith.constant 0 : index
    %1 = vector.load %arg1[%c0_1, %c0_2] : memref<8x1024xbf16, #tpu.memory_space<vmem>>, vector<8x1024xbf16>
    %c0_3 = arith.constant 0 : index
    %c0_4 = arith.constant 0 : index
    %2 = vector.load %arg2[%c0_3, %c0_4] : memref<1024x128xbf16, #tpu.memory_space<vmem>>, vector<1024x128xbf16>
    %cst = arith.constant dense<0.000000e+00> : vector<8x128xf32>
    %3 = tpu.matmul %1, %2, %cst {dimension_numbers = #tpu.dot_dimension_numbers<[1], [0], [0], [1], [0, 0, 1, 1], [], []>} : vector<8x1024xbf16>, vector<1024x128xbf16>, vector<8x128xf32> -> vector<8x128xf32>
    %c0_5 = arith.constant 0 : index
    %c0_6 = arith.constant 0 : index
    %4 = vector.load %arg13[%c0_5, %c0_6] : memref<8x128xf32, #tpu.memory_space<vmem>>, vector<8x128xf32>
    tpu.vector_store %arg13[%c0_5, %c0_6], %3 {strides = array<i32>} : memref<8x128xf32, #tpu.memory_space<vmem>>, vector<8x128xf32>,
    %c0_7 = arith.constant 0 : index
    %c0_8 = arith.constant 0 : index
    %5 = vector.load %arg3[%c0_7, %c0_8] : memref<128x256xbf16, #tpu.memory_space<vmem>>, vector<128x256xbf16>
    %c0_9 = arith.constant 0 : index
    %c0_10 = arith.constant 0 : index
    %6 = vector.load %arg4[%c0_9, %c0_10] : memref<1x256xf32, #tpu.memory_space<vmem>>, vector<1x256xf32>
    %c0_11 = arith.constant 0 : index
    %c0_12 = arith.constant 0 : index
    %7 = vector.load %arg5[%c0_11, %c0_12] : memref<1x256xf32, #tpu.memory_space<vmem>>, vector<1x256xf32>
    %c0_13 = arith.constant 0 : index
    %c0_14 = arith.constant 0 : index
    %8 = vector.load %arg6[%c0_13, %c0_14] : memref<256x128xbf16, #tpu.memory_space<vmem>>, vector<256x128xbf16>
    %c0_15 = arith.constant 0 : index
    %c0_16 = arith.constant 0 : index
    %9 = vector.load %arg7[%c0_15, %c0_16] : memref<1x128xf32, #tpu.memory_space<vmem>>, vector<1x128xf32>
    %10 = arith.truncf %3 : vector<8x128xf32> to vector<8x128xbf16>
    %cst_17 = arith.constant dense<0.000000e+00> : vector<8x256xf32>
    %11 = tpu.matmul %10, %5, %cst_17 {dimension_numbers = #tpu.dot_dimension_numbers<[1], [0], [0], [1], [0, 0, 1, 1], [], []>} : vector<8x128xbf16>, vector<128x256xbf16>, vector<8x256xf32> -> vector<8x256xf32>
    %12 = vector.broadcast %0 : vector<8x1xf32> to vector<8x256xf32>
    %13 = arith.mulf %11, %12 : vector<8x256xf32>
    %cst_18 = arith.constant dense<0.000000e+00> : vector<256xf32>
    %14 = vector.multi_reduction <add>, %13, %cst_18 [0] : vector<8x256xf32> to vector<256xf32>
    %15 = vector.shape_cast %14 : vector<256xf32> to vector<1x256xf32>
    %16 = arith.mulf %13, %11 : vector<8x256xf32>
    %cst_19 = arith.constant dense<0.000000e+00> : vector<256xf32>
    %17 = vector.multi_reduction <add>, %16, %cst_19 [0] : vector<8x256xf32> to vector<256xf32>
    %18 = vector.shape_cast %17 : vector<256xf32> to vector<1x256xf32>
    %19 = arith.mulf %15, %15 : vector<1x256xf32>
    %20 = arith.subf %18, %19 : vector<1x256xf32>
    %cst_20 = arith.constant 0.000000e+00 : f32
    %21 = vector.broadcast %cst_20 : f32 to vector<1x256xf32>
    %22 = arith.maximumf %20, %21 : vector<1x256xf32>
    %cst_21 = arith.constant 9.99999974E-6 : f32
    %23 = vector.broadcast %cst_21 : f32 to vector<1x256xf32>
    %24 = arith.addf %22, %23 : vector<1x256xf32>
    %25 = math.rsqrt %24 : vector<1x256xf32>
    %26 = vector.broadcast %15 : vector<1x256xf32> to vector<8x256xf32>
    %27 = arith.subf %11, %26 : vector<8x256xf32>
    %28 = arith.mulf %25, %6 : vector<1x256xf32>
    %29 = vector.broadcast %28 : vector<1x256xf32> to vector<8x256xf32>
    %30 = arith.mulf %27, %29 : vector<8x256xf32>
    %31 = vector.broadcast %7 : vector<1x256xf32> to vector<8x256xf32>
    %32 = arith.addf %30, %31 : vector<8x256xf32>
    %cst_22 = arith.constant 0.000000e+00 : f32
    %33 = vector.broadcast %cst_22 : f32 to vector<8x256xf32>
    %34 = arith.maximumf %32, %33 : vector<8x256xf32>
    %35 = arith.truncf %34 : vector<8x256xf32> to vector<8x256xbf16>
    %cst_23 = arith.constant dense<0.000000e+00> : vector<8x128xf32>
    %36 = tpu.matmul %35, %8, %cst_23 {dimension_numbers = #tpu.dot_dimension_numbers<[1], [0], [0], [1], [0, 0, 1, 1], [], []>} : vector<8x256xbf16>, vector<256x128xbf16>, vector<8x128xf32> -> vector<8x128xf32>
    %37 = vector.broadcast %9 : vector<1x128xf32> to vector<8x128xf32>
    %38 = arith.addf %36, %37 : vector<8x128xf32>
    %c0_24 = arith.constant 0 : index
    %c0_25 = arith.constant 0 : index
    %39 = vector.load %arg14[%c0_24, %c0_25] : memref<8x128xf32, #tpu.memory_space<vmem>>, vector<8x128xf32>
    tpu.vector_store %arg14[%c0_24, %c0_25], %38 {strides = array<i32>} : memref<8x128xf32, #tpu.memory_space<vmem>>, vector<8x128xf32>,
    %c0_26 = arith.constant 0 : index
    %c0_27 = arith.constant 0 : index
    %40 = vector.load %arg8[%c0_26, %c0_27] : memref<128x256xbf16, #tpu.memory_space<vmem>>, vector<128x256xbf16>
    %c0_28 = arith.constant 0 : index
    %c0_29 = arith.constant 0 : index
    %41 = vector.load %arg9[%c0_28, %c0_29] : memref<1x256xf32, #tpu.memory_space<vmem>>, vector<1x256xf32>
    %c0_30 = arith.constant 0 : index
    %c0_31 = arith.constant 0 : index
    %42 = vector.load %arg10[%c0_30, %c0_31] : memref<1x256xf32, #tpu.memory_space<vmem>>, vector<1x256xf32>
    %c0_32 = arith.constant 0 : index
    %c0_33 = arith.constant 0 : index
    %43 = vector.load %arg11[%c0_32, %c0_33] : memref<256x128xbf16, #tpu.memory_space<vmem>>, vector<256x128xbf16>
    %c0_34 = arith.constant 0 : index
    %c0_35 = arith.constant 0 : index
    %44 = vector.load %arg12[%c0_34, %c0_35] : memref<1x128xf32, #tpu.memory_space<vmem>>, vector<1x128xf32>
    %45 = arith.truncf %38 : vector<8x128xf32> to vector<8x128xbf16>
    %cst_36 = arith.constant dense<0.000000e+00> : vector<8x256xf32>
    %46 = tpu.matmul %45, %40, %cst_36 {dimension_numbers = #tpu.dot_dimension_numbers<[1], [0], [0], [1], [0, 0, 1, 1], [], []>} : vector<8x128xbf16>, vector<128x256xbf16>, vector<8x256xf32> -> vector<8x256xf32>
    %47 = vector.broadcast %0 : vector<8x1xf32> to vector<8x256xf32>
    %48 = arith.mulf %46, %47 : vector<8x256xf32>
    %cst_37 = arith.constant dense<0.000000e+00> : vector<256xf32>
    %49 = vector.multi_reduction <add>, %48, %cst_37 [0] : vector<8x256xf32> to vector<256xf32>
    %50 = vector.shape_cast %49 : vector<256xf32> to vector<1x256xf32>
    %51 = arith.mulf %48, %46 : vector<8x256xf32>
    %cst_38 = arith.constant dense<0.000000e+00> : vector<256xf32>
    %52 = vector.multi_reduction <add>, %51, %cst_38 [0] : vector<8x256xf32> to vector<256xf32>
    %53 = vector.shape_cast %52 : vector<256xf32> to vector<1x256xf32>
    %54 = arith.mulf %50, %50 : vector<1x256xf32>
    %55 = arith.subf %53, %54 : vector<1x256xf32>
    %cst_39 = arith.constant 0.000000e+00 : f32
    %56 = vector.broadcast %cst_39 : f32 to vector<1x256xf32>
    %57 = arith.maximumf %55, %56 : vector<1x256xf32>
    %cst_40 = arith.constant 9.99999974E-6 : f32
    %58 = vector.broadcast %cst_40 : f32 to vector<1x256xf32>
    %59 = arith.addf %57, %58 : vector<1x256xf32>
    %60 = math.rsqrt %59 : vector<1x256xf32>
    %61 = vector.broadcast %50 : vector<1x256xf32> to vector<8x256xf32>
    %62 = arith.subf %46, %61 : vector<8x256xf32>
    %63 = arith.mulf %60, %41 : vector<1x256xf32>
    %64 = vector.broadcast %63 : vector<1x256xf32> to vector<8x256xf32>
    %65 = arith.mulf %62, %64 : vector<8x256xf32>
    %66 = vector.broadcast %42 : vector<1x256xf32> to vector<8x256xf32>
    %67 = arith.addf %65, %66 : vector<8x256xf32>
    %cst_41 = arith.constant 0.000000e+00 : f32
    %68 = vector.broadcast %cst_41 : f32 to vector<8x256xf32>
    %69 = arith.maximumf %67, %68 : vector<8x256xf32>
    %70 = arith.truncf %69 : vector<8x256xf32> to vector<8x256xbf16>
    %cst_42 = arith.constant dense<0.000000e+00> : vector<8x128xf32>
    %71 = tpu.matmul %70, %43, %cst_42 {dimension_numbers = #tpu.dot_dimension_numbers<[1], [0], [0], [1], [0, 0, 1, 1], [], []>} : vector<8x256xbf16>, vector<256x128xbf16>, vector<8x128xf32> -> vector<8x128xf32>
    %72 = vector.broadcast %44 : vector<1x128xf32> to vector<8x128xf32>
    %73 = arith.addf %71, %72 : vector<8x128xf32>
    %c0_43 = arith.constant 0 : index
    %c0_44 = arith.constant 0 : index
    %74 = vector.load %arg15[%c0_43, %c0_44] : memref<8x128xf32, #tpu.memory_space<vmem>>, vector<8x128xf32>
    tpu.vector_store %arg15[%c0_43, %c0_44], %73 {strides = array<i32>} : memref<8x128xf32, #tpu.memory_space<vmem>>, vector<8x128xf32>,
    return
  }
}

</mosaic_0001>

<llo_original>
// kernel: siamese_arm_forward.1
$region0: #{siamese_arm_forward.1}
  #allocation0 [shape = 'u32[]', space=smem, size = 0x4, offset = 0x4, fixed_abs, tag = 'smem constant byte address 0x4 - core index']
  #allocation1 [shape = 'u32[144,128]{1,0:T(1,128)}', space=vmem, size = 0x12000, scoped, tag = 'internal scratch']
  %s0 = inlined_call_operand.vmem [shape: f32[8,1], index: 0, kind: input, shape index: {}]
  %s1 = inlined_call_operand.vmem [shape: bf16[8,1024], index: 1, kind: input, shape index: {}]
  %s2 = inlined_call_operand.hbm [shape: bf16[1024,128], index: 2, kind: input, shape index: {}]
  %s3 = inlined_call_operand.vmem [shape: bf16[128,256], index: 3, kind: input, shape index: {}]
  %s4 = inlined_call_operand.vmem [shape: f32[1,256], index: 4, kind: input, shape index: {}]
  %s5 = inlined_call_operand.vmem [shape: f32[1,256], index: 5, kind: input, shape index: {}]
  %s6 = inlined_call_operand.vmem [shape: bf16[256,128], index: 6, kind: input, shape index: {}]
  %s7 = inlined_call_operand.vmem [shape: f32[1,128], index: 7, kind: input, shape index: {}]
  %s8 = inlined_call_operand.hbm [shape: bf16[128,256], index: 8, kind: input, shape index: {}]
  %s9 = inlined_call_operand.vmem [shape: f32[1,256], index: 9, kind: input, shape index: {}]
  %s10 = inlined_call_operand.vmem [shape: f32[1,256], index: 10, kind: input, shape index: {}]
  %s11 = inlined_call_operand.hbm [shape: bf16[256,128], index: 11, kind: input, shape index: {}]
  %s12 = inlined_call_operand.vmem [shape: f32[1,128], index: 12, kind: input, shape index: {}]
  %s13 = inlined_call_operand.vmem [shape: f32[8,128], index: 13, kind: output, shape index: {0}]
  %s14 = inlined_call_operand.vmem [shape: f32[8,128], index: 14, kind: output, shape index: {1}]
  %s15 = inlined_call_operand.vmem [shape: f32[8,128], index: 15, kind: output, shape index: {2}]
  %16 = xla_tuple %s13, %s14, %s15
  %s17 = sld [smem:[#allocation0]]
  $region90: #{siamese_arm_forward.1} parent=0
    _
  %s19 = ssub.s32 1, %s17
  %s20 = scalar_select 0, %s19, %s17
  $region1: #{siamese_arm_forward.1} parent=0
    #allocation2 [shape = 'u8[262144]{0}', space=vmem, size = 0x40000, scoped, tag = 'input window, operand 2, single buffered']
    #allocation3 [shape = 's32[1]{0}', space=sflag, size = 0x4, scoped, tag = 'scoped memory for siamese_arm_forward.1']
    #allocation4 [shape = 'u8[65536]{0}', space=vmem, size = 0x10000, scoped, tag = 'input window, operand 8, single buffered']
    #allocation5 [shape = 's32[1]{0}', space=sflag, size = 0x4, scoped, tag = 'scoped memory for siamese_arm_forward.1']
    #allocation6 [shape = 'u8[65536]{0}', space=vmem, size = 0x10000, scoped, tag = 'input window, operand 11, single buffered']
    %21 = vsyncpa [#allocation3], 0
    %22 = vsyncpa [#allocation5], 0
    // Predicated region
    $region2: #{siamese_arm_forward.1} parent=1 // pred_check
      _
    $region3: #{siamese_arm_forward.1} parent=1 // pred_check_branch
      %24 = sbr.rel (0) target = $region5
    $region4: #{siamese_arm_forward.1} parent=1 // pred_region
      _
    $region5: #{siamese_arm_forward.1} parent=1 // pred_fallthru
      _
    // Predicated region
    $region6: #{siamese_arm_forward.1} parent=1 // pred_check
      _
    $region7: #{siamese_arm_forward.1} parent=1 // pred_check_branch
      %26 = sbr.rel (0) target = $region9
    $region8: #{siamese_arm_forward.1} parent=1 // pred_region
      _
    $region9: #{siamese_arm_forward.1} parent=1 // pred_fallthru
      _
    // Predicated region
    $region10: #{siamese_arm_forward.1} parent=1 // pred_check
      _
    $region11: #{siamese_arm_forward.1} parent=1 // pred_check_branch
      %28 = sbr.rel (0) target = $region13
    $region12: #{siamese_arm_forward.1} parent=1 // pred_region
      %s30 = ssub.s32 8192, 8192
      %31 = vsyncadd [#allocation3], %s30
      %s32 = sshll.u32 [#allocation2], 4
      %s33 = int_to_ptr.vmem [resolvable:$true] %s32
      %38 = dma.hbm_to_vmem [thread:$0]  %s2, 8192, %s33, [#allocation3], 64, 64, 4
    $region13: #{siamese_arm_forward.1} parent=1 // pred_fallthru
      _
    // Predicated region
    $region14: #{siamese_arm_forward.1} parent=1 // pred_check
      _
    $region15: #{siamese_arm_forward.1} parent=1 // pred_check_branch
      %40 = sbr.rel (0) target = $region17
    $region16: #{siamese_arm_forward.1} parent=1 // pred_region
      _
    $region17: #{siamese_arm_forward.1} parent=1 // pred_fallthru
      _
    // Predicated region
    $region18: #{siamese_arm_forward.1} parent=1 // pred_check
      _
    $region19: #{siamese_arm_forward.1} parent=1 // pred_check_branch
      %42 = sbr.rel (0) target = $region21
    $region20: #{siamese_arm_forward.1} parent=1 // pred_region
      _
    $region21: #{siamese_arm_forward.1} parent=1 // pred_fallthru
      _
    // Predicated region
    $region22: #{siamese_arm_forward.1} parent=1 // pred_check
      _
    $region23: #{siamese_arm_forward.1} parent=1 // pred_check_branch
      %44 = sbr.rel (0) target = $region25
    $region24: #{siamese_arm_forward.1} parent=1 // pred_region
      _
    $region25: #{siamese_arm_forward.1} parent=1 // pred_fallthru
      _
    // Predicated region
    $region26: #{siamese_arm_forward.1} parent=1 // pred_check
      _
    $region27: #{siamese_arm_forward.1} parent=1 // pred_check_branch
      %46 = sbr.rel (0) target = $region29
    $region28: #{siamese_arm_forward.1} parent=1 // pred_region
      _
    $region29: #{siamese_arm_forward.1} parent=1 // pred_fallthru
      _
    // Predicated region
    $region30: #{siamese_arm_forward.1} parent=1 // pred_check
      _
    $region31: #{siamese_arm_forward.1} parent=1 // pred_check_branch
      %48 = sbr.rel (0) target = $region33
    $region32: #{siamese_arm_forward.1} parent=1 // pred_region
      _
    $region33: #{siamese_arm_forward.1} parent=1 // pred_fallthru
      _
    // Predicated region
    $region34: #{siamese_arm_forward.1} parent=1 // pred_check
      _
    $region35: #{siamese_arm_forward.1} parent=1 // pred_check_branch
      %50 = sbr.rel (0) target = $region37
    $region36: #{siamese_arm_forward.1} parent=1 // pred_region
      %s52 = ssub.s32 2048, 2048
      %53 = vsyncadd [#allocation5], %s52
      %s54 = sshll.u32 [#allocation4], 4
      %s55 = int_to_ptr.vmem [resolvable:$true] %s54
      %60 = dma.hbm_to_vmem [thread:$0]  %s8, 2048, %s55, [#allocation5], 128, 128, 8
    $region37: #{siamese_arm_forward.1} parent=1 // pred_fallthru
      _
    // Predicated region
    $region38: #{siamese_arm_forward.1} parent=1 // pred_check
      _
    $region39: #{siamese_arm_forward.1} parent=1 // pred_check_branch
      %62 = sbr.rel (0) target = $region41
    $region40: #{siamese_arm_forward.1} parent=1 // pred_region
      _
    $region41: #{siamese_arm_forward.1} parent=1 // pred_fallthru
      _
    // Predicated region
    $region42: #{siamese_arm_forward.1} parent=1 // pred_check
      _
    $region43: #{siamese_arm_forward.1} parent=1 // pred_check_branch
      %64 = sbr.rel (0) target = $region45
    $region44: #{siamese_arm_forward.1} parent=1 // pred_region
      _
    $region45: #{siamese_arm_forward.1} parent=1 // pred_fallthru
      _
    // Predicated region
    $region46: #{siamese_arm_forward.1} parent=1 // pred_check
      _
    $region47: #{siamese_arm_forward.1} parent=1 // pred_check_branch
      %66 = sbr.rel (0) target = $region49
    $region48: #{siamese_arm_forward.1} parent=1 // pred_region
      %s68 = ssub.s32 2048, 2048
      %69 = vsyncadd [#allocation5], %s68
      %s70 = sshll.u32 [#allocation6], 4
      %s71 = int_to_ptr.vmem [resolvable:$true] %s70
      %76 = dma.hbm_to_vmem [thread:$0]  %s11, 2048, %s71, [#allocation5], 64, 64, 4
    $region49: #{siamese_arm_forward.1} parent=1 // pred_fallthru
      _
    // Predicated region
    $region50: #{siamese_arm_forward.1} parent=1 // pred_check
      _
    $region51: #{siamese_arm_forward.1} parent=1 // pred_check_branch
      %78 = sbr.rel (0) target = $region53
    $region52: #{siamese_arm_forward.1} parent=1 // pred_region
      _
    $region53: #{siamese_arm_forward.1} parent=1 // pred_fallthru
      _
    // Predicated region
    $region54: #{siamese_arm_forward.1} parent=1 // pred_check
      _
    $region55: #{siamese_arm_forward.1} parent=1 // pred_check_branch
      %80 = sbr.rel (0) target = $region57
    $region56: #{siamese_arm_forward.1} parent=1 // pred_region
      %81 = dma.done [#allocation3], 8192
    $region57: #{siamese_arm_forward.1} parent=1 // pred_fallthru
      _
    // Predicated region
    $region58: #{siamese_arm_forward.1} parent=1 // pred_check
      _
    $region59: #{siamese_arm_forward.1} parent=1 // pred_check_branch
      %83 = sbr.rel (0) target = $region61
    $region60: #{siamese_arm_forward.1} parent=1 // pred_region
      %84 = dma.done [#allocation5], 2048
    $region61: #{siamese_arm_forward.1} parent=1 // pred_fallthru
      _
    // Predicated region
    $region62: #{siamese_arm_forward.1} parent=1 // pred_check
      _
    $region63: #{siamese_arm_forward.1} parent=1 // pred_check_branch
      %86 = sbr.rel (0) target = $region65
    $region64: #{siamese_arm_forward.1} parent=1 // pred_region
      %87 = dma.done [#allocation5], 2048
    $region65: #{siamese_arm_forward.1} parent=1 // pred_fallthru
      _
    %v89 = vld [vmem:[%s0] sm:$0xff]
    %v90 = vld [vmem:[%s1] sm:$0xff]
    %v91 = vld [vmem:[%s1 + $0x8] sm:$0xff]
    %v92 = vld [vmem:[%s1 + $0x10] sm:$0xff]
    %v93 = vld [vmem:[%s1 + $0x18] sm:$0xff]
    %v94 = vld [vmem:[#allocation2] sm:$0xf]
    %v95 = vld [vmem:[#allocation2 + $0x4] sm:$0xf]
    %v96 = vld [vmem:[#allocation2 + $0x8] sm:$0xf]
    %v97 = vld [vmem:[#allocation2 + $0xc] sm:$0xf]
    %v98 = vld [vmem:[#allocation2 + $0x10] sm:$0xf]
    %v99 = vld [vmem:[#allocation2 + $0x14] sm:$0xf]
    %v100 = vld [vmem:[#allocation2 + $0x18] sm:$0xf]
    %v101 = vld [vmem:[#allocation2 + $0x1c] sm:$0xf]
    %v102 = vld [vmem:[#allocation2 + $0x20] sm:$0xf]
    %v103 = vld [vmem:[#allocation2 + $0x24] sm:$0xf]
    %v104 = vld [vmem:[#allocation2 + $0x28] sm:$0xf]
    %v105 = vld [vmem:[#allocation2 + $0x2c] sm:$0xf]
    %v106 = vld [vmem:[#allocation2 + $0x30] sm:$0xf]
    %v107 = vld [vmem:[#allocation2 + $0x34] sm:$0xf]
    %v108 = vld [vmem:[#allocation2 + $0x38] sm:$0xf]
    %v109 = vld [vmem:[#allocation2 + $0x3c] sm:$0xf]
    %v110 = vld [vmem:[#allocation2 + $0x40] sm:$0xf]
    %v111 = vld [vmem:[#allocation2 + $0x44] sm:$0xf]
    %v112 = vld [vmem:[#allocation2 + $0x48] sm:$0xf]
    %v113 = vld [vmem:[#allocation2 + $0x4c] sm:$0xf]
    %v114 = vld [vmem:[#allocation2 + $0x50] sm:$0xf]
    %v115 = vld [vmem:[#allocation2 + $0x54] sm:$0xf]
    %v116 = vld [vmem:[#allocation2 + $0x58] sm:$0xf]
    %v117 = vld [vmem:[#allocation2 + $0x5c] sm:$0xf]
    %v118 = vld [vmem:[#allocation2 + $0x60] sm:$0xf]
    %v119 = vld [vmem:[#allocation2 + $0x64] sm:$0xf]
    %v120 = vld [vmem:[#allocation2 + $0x68] sm:$0xf]
    %v121 = vld [vmem:[#allocation2 + $0x6c] sm:$0xf]
    %v122 = vld [vmem:[#allocation2 + $0x70] sm:$0xf]
    %v123 = vld [vmem:[#allocation2 + $0x74] sm:$0xf]
    %v124 = vld [vmem:[#allocation2 + $0x78] sm:$0xf]
    %v125 = vld [vmem:[#allocation2 + $0x7c] sm:$0xf]
    %v126 = vld [vmem:[#allocation2 + $0x80] sm:$0xf]
    %v127 = vld [vmem:[#allocation2 + $0x84] sm:$0xf]
    %v128 = vld [vmem:[#allocation2 + $0x88] sm:$0xf]
    %v129 = vld [vmem:[#allocation2 + $0x8c] sm:$0xf]
    %v130 = vld [vmem:[#allocation2 + $0x90] sm:$0xf]
    %v131 = vld [vmem:[#allocation2 + $0x94] sm:$0xf]
    %v132 = vld [vmem:[#allocation2 + $0x98] sm:$0xf]
    %v133 = vld [vmem:[#allocation2 + $0x9c] sm:$0xf]
    %v134 = vld [vmem:[#allocation2 + $0xa0] sm:$0xf]
    %v135 = vld [vmem:[#allocation2 + $0xa4] sm:$0xf]
    %v136 = vld [vmem:[#allocation2 + $0xa8] sm:$0xf]
    %v137 = vld [vmem:[#allocation2 + $0xac] sm:$0xf]
    %v138 = vld [vmem:[#allocation2 + $0xb0] sm:$0xf]
    %v139 = vld [vmem:[#allocation2 + $0xb4] sm:$0xf]
    %v140 = vld [vmem:[#allocation2 + $0xb8] sm:$0xf]
    %v141 = vld [vmem:[#allocation2 + $0xbc] sm:$0xf]
    %v142 = vld [vmem:[#allocation2 + $0xc0] sm:$0xf]
    %v143 = vld [vmem:[#allocation2 + $0xc4] sm:$0xf]
    %v144 = vld [vmem:[#allocation2 + $0xc8] sm:$0xf]
    %v145 = vld [vmem:[#allocation2 + $0xcc] sm:$0xf]
    %v146 = vld [vmem:[#allocation2 + $0xd0] sm:$0xf]
    %v147 = vld [vmem:[#allocation2 + $0xd4] sm:$0xf]
    %v148 = vld [vmem:[#allocation2 + $0xd8] sm:$0xf]
    %v149 = vld [vmem:[#allocation2 + $0xdc] sm:$0xf]
    %v150 = vld [vmem:[#allocation2 + $0xe0] sm:$0xf]
    %v151 = vld [vmem:[#allocation2 + $0xe4] sm:$0xf]
    %v152 = vld [vmem:[#allocation2 + $0xe8] sm:$0xf]
    %v153 = vld [vmem:[#allocation2 + $0xec] sm:$0xf]
    %v154 = vld [vmem:[#allocation2 + $0xf0] sm:$0xf]
    %v155 = vld [vmem:[#allocation2 + $0xf4] sm:$0xf]
    %v156 = vld [vmem:[#allocation2 + $0xf8] sm:$0xf]
    %v157 = vld [vmem:[#allocation2 + $0xfc] sm:$0xf]
    %v158 = vld [vmem:[#allocation2 + $0x100] sm:$0xf]
    %v159 = vld [vmem:[#allocation2 + $0x104] sm:$0xf]
    %v160 = vld [vmem:[#allocation2 + $0x108] sm:$0xf]
    %v161 = vld [vmem:[#allocation2 + $0x10c] sm:$0xf]
    %v162 = vld [vmem:[#allocation2 + $0x110] sm:$0xf]
    %v163 = vld [vmem:[#allocation2 + $0x114] sm:$0xf]
    %v164 = vld [vmem:[#allocation2 + $0x118] sm:$0xf]
    %v165 = vld [vmem:[#allocation2 + $0x11c] sm:$0xf]
    %v166 = vld [vmem:[#allocation2 + $0x120] sm:$0xf]
    %v167 = vld [vmem:[#allocation2 + $0x124] sm:$0xf]
    %v168 = vld [vmem:[#allocation2 + $0x128] sm:$0xf]
    %v169 = vld [vmem:[#allocation2 + $0x12c] sm:$0xf]
    %v170 = vld [vmem:[#allocation2 + $0x130] sm:$0xf]
    %v171 = vld [vmem:[#allocation2 + $0x134] sm:$0xf]
    %v172 = vld [vmem:[#allocation2 + $0x138] sm:$0xf]
    %v173 = vld [vmem:[#allocation2 + $0x13c] sm:$0xf]
    %v174 = vld [vmem:[#allocation2 + $0x140] sm:$0xf]
    %v175 = vld [vmem:[#allocation2 + $0x144] sm:$0xf]
    %v176 = vld [vmem:[#allocation2 + $0x148] sm:$0xf]
    %v177 = vld [vmem:[#allocation2 + $0x14c] sm:$0xf]
    %v178 = vld [vmem:[#allocation2 + $0x150] sm:$0xf]
    %v179 = vld [vmem:[#allocation2 + $0x154] sm:$0xf]
    %v180 = vld [vmem:[#allocation2 + $0x158] sm:$0xf]
    %v181 = vld [vmem:[#allocation2 + $0x15c] sm:$0xf]
    %v182 = vld [vmem:[#allocation2 + $0x160] sm:$0xf]
    %v183 = vld [vmem:[#allocation2 + $0x164] sm:$0xf]
    %v184 = vld [vmem:[#allocation2 + $0x168] sm:$0xf]
    %v185 = vld [vmem:[#allocation2 + $0x16c] sm:$0xf]
    %v186 = vld [vmem:[#allocation2 + $0x170] sm:$0xf]
    %v187 = vld [vmem:[#allocation2 + $0x174] sm:$0xf]
    %v188 = vld [vmem:[#allocation2 + $0x178] sm:$0xf]
    %v189 = vld [vmem:[#allocation2 + $0x17c] sm:$0xf]
    %v190 = vld [vmem:[#allocation2 + $0x180] sm:$0xf]
    %v191 = vld [vmem:[#allocation2 + $0x184] sm:$0xf]
    %v192 = vld [vmem:[#allocation2 + $0x188] sm:$0xf]
    %v193 = vld [vmem:[#allocation2 + $0x18c] sm:$0xf]
    %v194 = vld [vmem:[#allocation2 + $0x190] sm:$0xf]
    %v195 = vld [vmem:[#allocation2 + $0x194] sm:$0xf]
    %v196 = vld [vmem:[#allocation2 + $0x198] sm:$0xf]
    %v197 = vld [vmem:[#allocation2 + $0x19c] sm:$0xf]
    %v198 = vld [vmem:[#allocation2 + $0x1a0] sm:$0xf]
    %v199 = vld [vmem:[#allocation2 + $0x1a4] sm:$0xf]
    %v200 = vld [vmem:[#allocation2 + $0x1a8] sm:$0xf]
    %v201 = vld [vmem:[#allocation2 + $0x1ac] sm:$0xf]
    %v202 = vld [vmem:[#allocation2 + $0x1b0] sm:$0xf]
    %v203 = vld [vmem:[#allocation2 + $0x1b4] sm:$0xf]
    %v204 = vld [vmem:[#allocation2 + $0x1b8] sm:$0xf]
    %v205 = vld [vmem:[#allocation2 + $0x1bc] sm:$0xf]
    %v206 = vld [vmem:[#allocation2 + $0x1c0] sm:$0xf]
    %v207 = vld [vmem:[#allocation2 + $0x1c4] sm:$0xf]
    %v208 = vld [vmem:[#allocation2 + $0x1c8] sm:$0xf]
    %v209 = vld [vmem:[#allocation2 + $0x1cc] sm:$0xf]
    %v210 = vld [vmem:[#allocation2 + $0x1d0] sm:$0xf]
    %v211 = vld [vmem:[#allocation2 + $0x1d4] sm:$0xf]
    %v212 = vld [vmem:[#allocation2 + $0x1d8] sm:$0xf]
    %v213 = vld [vmem:[#allocation2 + $0x1dc] sm:$0xf]
    %v214 = vld [vmem:[#allocation2 + $0x1e0] sm:$0xf]
    %v215 = vld [vmem:[#allocation2 + $0x1e4] sm:$0xf]
    %v216 = vld [vmem:[#allocation2 + $0x1e8] sm:$0xf]
    %v217 = vld [vmem:[#allocation2 + $0x1ec] sm:$0xf]
    %v218 = vld [vmem:[#allocation2 + $0x1f0] sm:$0xf]
    %v219 = vld [vmem:[#allocation2 + $0x1f4] sm:$0xf]
    %v220 = vld [vmem:[#allocation2 + $0x1f8] sm:$0xf]
    %v221 = vld [vmem:[#allocation2 + $0x1fc] sm:$0xf]
    %v226 = vunpack.c.l.b16 %v90
    %v227 = vunpack.c.h.b16 %v90
    %v228 = vunpack.c.l.b16 %v91
    %v229 = vunpack.c.h.b16 %v91
    %v230 = vunpack.c.l.b16 %v92
    %v231 = vunpack.c.h.b16 %v92
    %v232 = vunpack.c.l.b16 %v93
    %v233 = vunpack.c.h.b16 %v93
    %v234 = vpack.c.b16 %v226, %v226
    %v235 = vpack.c.b16 %v227, %v227
    %v236 = vpack.c.b16 %v228, %v228
    %v237 = vpack.c.b16 %v229, %v229
    %v238 = vpack.c.b16 %v230, %v230
    %v239 = vpack.c.b16 %v231, %v231
    %v240 = vpack.c.b16 %v232, %v232
    %v241 = vpack.c.b16 %v233, %v233
    %v378 = vunpack.c.l.b16 %v94
    %v379 = vunpack.c.l.b16 %v95
    %v380 = vunpack.c.l.b16 %v96
    %v381 = vunpack.c.l.b16 %v97
    %v382 = vunpack.c.l.b16 %v98
    %v383 = vunpack.c.l.b16 %v99
    %v384 = vunpack.c.l.b16 %v100
    %v385 = vunpack.c.l.b16 %v101
    %v386 = vunpack.c.l.b16 %v102
    %v387 = vunpack.c.l.b16 %v103
    %v388 = vunpack.c.l.b16 %v104
    %v389 = vunpack.c.l.b16 %v105
    %v390 = vunpack.c.l.b16 %v106
    %v391 = vunpack.c.l.b16 %v107
    %v392 = vunpack.c.l.b16 %v108
    %v393 = vunpack.c.l.b16 %v109
    %v394 = vunpack.c.l.b16 %v110
    %v395 = vunpack.c.l.b16 %v111
    %v396 = vunpack.c.l.b16 %v112
    %v397 = vunpack.c.l.b16 %v113
    %v398 = vunpack.c.l.b16 %v114
    %v399 = vunpack.c.l.b16 %v115
    %v400 = vunpack.c.l.b16 %v116
    %v401 = vunpack.c.l.b16 %v117
    %v402 = vunpack.c.l.b16 %v118
    %v403 = vunpack.c.l.b16 %v119
    %v404 = vunpack.c.l.b16 %v120
    %v405 = vunpack.c.l.b16 %v121
    %v406 = vunpack.c.l.b16 %v122
    %v407 = vunpack.c.l.b16 %v123
    %v408 = vunpack.c.l.b16 %v124
    %v409 = vunpack.c.l.b16 %v125
    %v410 = vunpack.c.l.b16 %v126
    %v411 = vunpack.c.l.b16 %v127
    %v412 = vunpack.c.l.b16 %v128
    %v413 = vunpack.c.l.b16 %v129
    %v414 = vunpack.c.l.b16 %v130
    %v415 = vunpack.c.l.b16 %v131
    %v416 = vunpack.c.l.b16 %v132
    %v417 = vunpack.c.l.b16 %v133
    %v418 = vunpack.c.l.b16 %v134
    %v419 = vunpack.c.l.b16 %v135
    %v420 = vunpack.c.l.b16 %v136
    %v421 = vunpack.c.l.b16 %v137
    %v422 = vunpack.c.l.b16 %v138
    %v423 = vunpack.c.l.b16 %v139
    %v424 = vunpack.c.l.b16 %v140
    %v425 = vunpack.c.l.b16 %v141
    %v426 = vunpack.c.l.b16 %v142
    %v427 = vunpack.c.l.b16 %v143
    %v428 = vunpack.c.l.b16 %v144
    %v429 = vunpack.c.l.b16 %v145
    %v430 = vunpack.c.l.b16 %v146
    %v431 = vunpack.c.l.b16 %v147
    %v432 = vunpack.c.l.b16 %v148
    %v433 = vunpack.c.l.b16 %v149
    %v434 = vunpack.c.l.b16 %v150
    %v435 = vunpack.c.l.b16 %v151
    %v436 = vunpack.c.l.b16 %v152
    %v437 = vunpack.c.l.b16 %v153
    %v438 = vunpack.c.l.b16 %v154
    %v439 = vunpack.c.l.b16 %v155
    %v440 = vunpack.c.l.b16 %v156
    %v441 = vunpack.c.l.b16 %v157
    %v442 = vunpack.c.l.b16 %v158
    %v443 = vunpack.c.l.b16 %v159
    %v444 = vunpack.c.l.b16 %v160
    %v445 = vunpack.c.l.b16 %v161
    %v446 = vunpack.c.l.b16 %v162
    %v447 = vunpack.c.l.b16 %v163
    %v448 = vunpack.c.l.b16 %v164
    %v449 = vunpack.c.l.b16 %v165
    %v450 = vunpack.c.l.b16 %v166
    %v451 = vunpack.c.l.b16 %v167
    %v452 = vunpack.c.l.b16 %v168
    %v453 = vunpack.c.l.b16 %v169
    %v454 = vunpack.c.l.b16 %v170
    %v455 = vunpack.c.l.b16 %v171
    %v456 = vunpack.c.l.b16 %v172
    %v457 = vunpack.c.l.b16 %v173
    %v458 = vunpack.c.l.b16 %v174
    %v459 = vunpack.c.l.b16 %v175
    %v460 = vunpack.c.l.b16 %v176
    %v461 = vunpack.c.l.b16 %v177
    %v462 = vunpack.c.l.b16 %v178
    %v463 = vunpack.c.l.b16 %v179
    %v464 = vunpack.c.l.b16 %v180
    %v465 = vunpack.c.l.b16 %v181
    %v466 = vunpack.c.l.b16 %v182
    %v467 = vunpack.c.l.b16 %v183
    %v468 = vunpack.c.l.b16 %v184
    %v469 = vunpack.c.l.b16 %v185
    %v470 = vunpack.c.l.b16 %v186
    %v471 = vunpack.c.l.b16 %v187
    %v472 = vunpack.c.l.b16 %v188
    %v473 = vunpack.c.l.b16 %v189
    %v474 = vunpack.c.l.b16 %v190
    %v475 = vunpack.c.l.b16 %v191
    %v476 = vunpack.c.l.b16 %v192
    %v477 = vunpack.c.l.b16 %v193
    %v478 = vunpack.c.l.b16 %v194
    %v479 = vunpack.c.l.b16 %v195
    %v480 = vunpack.c.l.b16 %v196
    %v481 = vunpack.c.l.b16 %v197
    %v482 = vunpack.c.l.b16 %v198
    %v483 = vunpack.c.l.b16 %v199
    %v484 = vunpack.c.l.b16 %v200
    %v485 = vunpack.c.l.b16 %v201
    %v486 = vunpack.c.l.b16 %v202
    %v487 = vunpack.c.l.b16 %v203
    %v488 = vunpack.c.l.b16 %v204
    %v489 = vunpack.c.l.b16 %v205
    %v490 = vunpack.c.l.b16 %v206
    %v491 = vunpack.c.l.b16 %v207
    %v492 = vunpack.c.l.b16 %v208
    %v493 = vunpack.c.l.b16 %v209
    %v494 = vunpack.c.l.b16 %v210
    %v495 = vunpack.c.l.b16 %v211
    %v496 = vunpack.c.l.b16 %v212
    %v497 = vunpack.c.l.b16 %v213
    %v498 = vunpack.c.l.b16 %v214
    %v499 = vunpack.c.l.b16 %v215
    %v500 = vunpack.c.l.b16 %v216
    %v501 = vunpack.c.l.b16 %v217
    %v502 = vunpack.c.l.b16 %v218
    %v503 = vunpack.c.l.b16 %v219
    %v504 = vunpack.c.l.b16 %v220
    %v505 = vunpack.c.l.b16 %v221
    %v506 = vpack.c.b16 %v379, %v378
    %v507 = vpack.c.b16 %v381, %v380
    %v508 = vpack.c.b16 %v383, %v382
    %v509 = vpack.c.b16 %v385, %v384
    %v510 = vpack.c.b16 %v387, %v386
    %v511 = vpack.c.b16 %v389, %v388
    %v512 = vpack.c.b16 %v391, %v390
    %v513 = vpack.c.b16 %v393, %v392
    %v514 = vpack.c.b16 %v395, %v394
    %v515 = vpack.c.b16 %v397, %v396
    %v516 = vpack.c.b16 %v399, %v398
    %v517 = vpack.c.b16 %v401, %v400
    %v518 = vpack.c.b16 %v403, %v402
    %v519 = vpack.c.b16 %v405, %v404
    %v520 = vpack.c.b16 %v407, %v406
    %v521 = vpack.c.b16 %v409, %v408
    %v522 = vpack.c.b16 %v411, %v410
    %v523 = vpack.c.b16 %v413, %v412
    %v524 = vpack.c.b16 %v415, %v414
    %v525 = vpack.c.b16 %v417, %v416
    %v526 = vpack.c.b16 %v419, %v418
    %v527 = vpack.c.b16 %v421, %v420
    %v528 = vpack.c.b16 %v423, %v422
    %v529 = vpack.c.b16 %v425, %v424
    %v530 = vpack.c.b16 %v427, %v426
    %v531 = vpack.c.b16 %v429, %v428
    %v532 = vpack.c.b16 %v431, %v430
    %v533 = vpack.c.b16 %v433, %v432
    %v534 = vpack.c.b16 %v435, %v434
    %v535 = vpack.c.b16 %v437, %v436
    %v536 = vpack.c.b16 %v439, %v438
    %v537 = vpack.c.b16 %v441, %v440
    %v538 = vpack.c.b16 %v443, %v442
    %v539 = vpack.c.b16 %v445, %v444
    %v540 = vpack.c.b16 %v447, %v446
    %v541 = vpack.c.b16 %v449, %v448
    %v542 = vpack.c.b16 %v451, %v450
    %v543 = vpack.c.b16 %v453, %v452
    %v544 = vpack.c.b16 %v455, %v454
    %v545 = vpack.c.b16 %v457, %v456
    %v546 = vpack.c.b16 %v459, %v458
    %v547 = vpack.c.b16 %v461, %v460
    %v548 = vpack.c.b16 %v463, %v462
    %v549 = vpack.c.b16 %v465, %v464
    %v550 = vpack.c.b16 %v467, %v466
    %v551 = vpack.c.b16 %v469, %v468
    %v552 = vpack.c.b16 %v471, %v470
    %v553 = vpack.c.b16 %v473, %v472
    %v554 = vpack.c.b16 %v475, %v474
    %v555 = vpack.c.b16 %v477, %v476
    %v556 = vpack.c.b16 %v479, %v478
    %v557 = vpack.c.b16 %v481, %v480
    %v558 = vpack.c.b16 %v483, %v482
    %v559 = vpack.c.b16 %v485, %v484
    %v560 = vpack.c.b16 %v487, %v486
    %v561 = vpack.c.b16 %v489, %v488
    %v562 = vpack.c.b16 %v491, %v490
    %v563 = vpack.c.b16 %v493, %v492
    %v564 = vpack.c.b16 %v495, %v494
    %v565 = vpack.c.b16 %v497, %v496
    %v566 = vpack.c.b16 %v499, %v498
    %v567 = vpack.c.b16 %v501, %v500
    %v568 = vpack.c.b16 %v503, %v502
    %v569 = vpack.c.b16 %v505, %v504
    %634 = vmatprep.subr.bf16.mxu0 0
    %635 = vmatpush1.bf16.msra.mxu0 %v506
    %636 = vmatprep.subr.bf16.mxu0 0
    %637 = vmatpush1.bf16.msra.mxu0 %v507
    %638 = vmatprep.subr.bf16.mxu0 0
    %639 = vmatpush1.bf16.msra.mxu0 %v508
    %640 = vmatprep.subr.bf16.mxu0 0
    %641 = vmatpush1.bf16.msra.mxu0 %v509
    %642 = vmatprep.subr.bf16.mxu0 0
    %643 = vmatpush1.bf16.msra.mxu0 %v510
    %644 = vmatprep.subr.bf16.mxu0 0
    %645 = vmatpush1.bf16.msra.mxu0 %v511
    %646 = vmatprep.subr.bf16.mxu0 0
    %647 = vmatpush1.bf16.msra.mxu0 %v512
    %648 = vmatprep.subr.bf16.mxu0 0
    %649 = vmatpush1.bf16.msra.mxu0 %v513
    %650 = vmatprep.subr.bf16.mxu0 0
    %651 = vmatpush1.bf16.msra.mxu0 %v514
    %652 = vmatprep.subr.bf16.mxu0 0
    %653 = vmatpush1.bf16.msra.mxu0 %v515
    %654 = vmatprep.subr.bf16.mxu0 0
    %655 = vmatpush1.bf16.msra.mxu0 %v516
    %656 = vmatprep.subr.bf16.mxu0 0
    %657 = vmatpush1.bf16.msra.mxu0 %v517
    %658 = vmatprep.subr.bf16.mxu0 0
    %659 = vmatpush1.bf16.msra.mxu0 %v518
    %660 = vmatprep.subr.bf16.mxu0 0
    %661 = vmatpush1.bf16.msra.mxu0 %v519
    %662 = vmatprep.subr.bf16.mxu0 0
    %663 = vmatpush1.bf16.msra.mxu0 %v520
    %664 = vmatprep.subr.bf16.mxu0 0
    %665 = vmatpush1.bf16.msra.mxu0 %v521
    %666 = vmatprep.mubr.bf16.mxu0 %v235
    %667 = vmatmul.mubr.bf16.gmra.mrb[0].mxu0 %v234
    %v668 = vpop.f32.mrb[0].mxu0
    %v669 = vadd.f32 0.0, %v668
    %v670 = vpop.f32.mrb[0].mxu0
    %v671 = vpop.f32.mrb[0].mxu0
    %v672 = vpop.f32.mrb[0].mxu0
    %673 = vdwg.mxu0
    %674 = vmatprep.subr.bf16.mxu0 0
    %675 = vmatpush1.bf16.msra.mxu0 %v522
    %676 = vmatprep.subr.bf16.mxu0 0
    %677 = vmatpush1.bf16.msra.mxu0 %v523
    %678 = vmatprep.subr.bf16.mxu0 0
    %679 = vmatpush1.bf16.msra.mxu0 %v524
    %680 = vmatprep.subr.bf16.mxu0 0
    %681 = vmatpush1.bf16.msra.mxu0 %v525
    %682 = vmatprep.subr.bf16.mxu0 0
    %683 = vmatpush1.bf16.msra.mxu0 %v526
    %684 = vmatprep.subr.bf16.mxu0 0
    %685 = vmatpush1.bf16.msra.mxu0 %v527
    %686 = vmatprep.subr.bf16.mxu0 0
    %687 = vmatpush1.bf16.msra.mxu0 %v528
    %688 = vmatprep.subr.bf16.mxu0 0
    %689 = vmatpush1.bf16.msra.mxu0 %v529
    %690 = vmatprep.subr.bf16.mxu0 0
    %691 = vmatpush1.bf16.msra.mxu0 %v530
    %692 = vmatprep.subr.bf16.mxu0 0
    %693 = vmatpush1.bf16.msra.mxu0 %v531
    %694 = vmatprep.subr.bf16.mxu0 0
    %695 = vmatpush1.bf16.msra.mxu0 %v532
    %696 = vmatprep.subr.bf16.mxu0 0
    %697 = vmatpush1.bf16.msra.mxu0 %v533
    %698 = vmatprep.subr.bf16.mxu0 0
    %699 = vmatpush1.bf16.msra.mxu0 %v534
    %700 = vmatprep.subr.bf16.mxu0 0
    %701 = vmatpush1.bf16.msra.mxu0 %v535
    %702 = vmatprep.subr.bf16.mxu0 0
    %703 = vmatpush1.bf16.msra.mxu0 %v536
    %704 = vmatprep.subr.bf16.mxu0 0
    %705 = vmatpush1.bf16.msra.mxu0 %v537
    %706 = vmatprep.mubr.bf16.mxu0 %v237
    %707 = vmatmul.mubr.bf16.gmra.mrb[0].mxu0 %v236
    %v708 = vpop.f32.mrb[0].mxu0
    %v709 = vadd.f32 %v669, %v708
    %v710 = vpop.f32.mrb[0].mxu0
    %v711 = vpop.f32.mrb[0].mxu0
    %v712 = vpop.f32.mrb[0].mxu0
    %713 = vdwg.mxu0
    %714 = vmatprep.subr.bf16.mxu0 0
    %715 = vmatpush1.bf16.msra.mxu0 %v538
    %716 = vmatprep.subr.bf16.mxu0 0
    %717 = vmatpush1.bf16.msra.mxu0 %v539
    %718 = vmatprep.subr.bf16.mxu0 0
    %719 = vmatpush1.bf16.msra.mxu0 %v540
    %720 = vmatprep.subr.bf16.mxu0 0
    %721 = vmatpush1.bf16.msra.mxu0 %v541
    %722 = vmatprep.subr.bf16.mxu0 0
    %723 = vmatpush1.bf16.msra.mxu0 %v542
    %724 = vmatprep.subr.bf16.mxu0 0
    %725 = vmatpush1.bf16.msra.mxu0 %v543
    %726 = vmatprep.subr.bf16.mxu0 0
    %727 = vmatpush1.bf16.msra.mxu0 %v544
    %728 = vmatprep.subr.bf16.mxu0 0
    %729 = vmatpush1.bf16.msra.mxu0 %v545
    %730 = vmatprep.subr.bf16.mxu0 0
    %731 = vmatpush1.bf16.msra.mxu0 %v546
    %732 = vmatprep.subr.bf16.mxu0 0
    %733 = vmatpush1.bf16.msra.mxu0 %v547
    %734 = vmatprep.subr.bf16.mxu0 0
    %735 = vmatpush1.bf16.msra.mxu0 %v548
    %736 = vmatprep.subr.bf16.mxu0 0
    %737 = vmatpush1.bf16.msra.mxu0 %v549
    %738 = vmatprep.subr.bf16.mxu0 0
    %739 = vmatpush1.bf16.msra.mxu0 %v550
    %740 = vmatprep.subr.bf16.mxu0 0
    %741 = vmatpush1.bf16.msra.mxu0 %v551
    %742 = vmatprep.subr.bf16.mxu0 0
    %743 = vmatpush1.bf16.msra.mxu0 %v552
    %744 = vmatprep.subr.bf16.mxu0 0
    %745 = vmatpush1.bf16.msra.mxu0 %v553
    %746 = vmatprep.mubr.bf16.mxu0 %v239
    %747 = vmatmul.mubr.bf16.gmra.mrb[0].mxu0 %v238
    %v748 = vpop.f32.mrb[0].mxu0
    %v749 = vadd.f32 %v709, %v748
    %v750 = vpop.f32.mrb[0].mxu0
    %v751 = vpop.f32.mrb[0].mxu0
    %v752 = vpop.f32.mrb[0].mxu0
    %753 = vdwg.mxu0
    %754 = vmatprep.subr.bf16.mxu0 0
    %755 = vmatpush1.bf16.msra.mxu0 %v554
    %756 = vmatprep.subr.bf16.mxu0 0
    %757 = vmatpush1.bf16.msra.mxu0 %v555
    %758 = vmatprep.subr.bf16.mxu0 0
    %759 = vmatpush1.bf16.msra.mxu0 %v556
    %760 = vmatprep.subr.bf16.mxu0 0
    %761 = vmatpush1.bf16.msra.mxu0 %v557
    %762 = vmatprep.subr.bf16.mxu0 0
    %763 = vmatpush1.bf16.msra.mxu0 %v558
    %764 = vmatprep.subr.bf16.mxu0 0
    %765 = vmatpush1.bf16.msra.mxu0 %v559
    %766 = vmatprep.subr.bf16.mxu0 0
    %767 = vmatpush1.bf16.msra.mxu0 %v560
    %768 = vmatprep.subr.bf16.mxu0 0
    %769 = vmatpush1.bf16.msra.mxu0 %v561
    %770 = vmatprep.subr.bf16.mxu0 0
    %771 = vmatpush1.bf16.msra.mxu0 %v562
    %772 = vmatprep.subr.bf16.mxu0 0
    %773 = vmatpush1.bf16.msra.mxu0 %v563
    %774 = vmatprep.subr.bf16.mxu0 0
    %775 = vmatpush1.bf16.msra.mxu0 %v564
    %776 = vmatprep.subr.bf16.mxu0 0
    %777 = vmatpush1.bf16.msra.mxu0 %v565
    %778 = vmatprep.subr.bf16.mxu0 0
    %779 = vmatpush1.bf16.msra.mxu0 %v566
    %780 = vmatprep.subr.bf16.mxu0 0
    %781 = vmatpush1.bf16.msra.mxu0 %v567
    %782 = vmatprep.subr.bf16.mxu0 0
    %783 = vmatpush1.bf16.msra.mxu0 %v568
    %784 = vmatprep.subr.bf16.mxu0 0
    %785 = vmatpush1.bf16.msra.mxu0 %v569
    %786 = vmatprep.mubr.bf16.mxu0 %v241
    %787 = vmatmul.mubr.bf16.gmra.mrb[0].mxu0 %v240
    %v788 = vpop.f32.mrb[0].mxu0
    %v789 = vadd.f32 %v749, %v788
    %v790 = vpop.f32.mrb[0].mxu0
    %v791 = vpop.f32.mrb[0].mxu0
    %v792 = vpop.f32.mrb[0].mxu0
    %793 = vdwg.mxu0
    %794 = vst [vmem:[%s13] sm:$0xff] %v789
    %v795 = vld [vmem:[%s3] sm:$0xff]
    %v796 = vld [vmem:[%s3 + $0x8] sm:$0xff]
    %v797 = vld [vmem:[%s3 + $0x10] sm:$0xff]
    %v798 = vld [vmem:[%s3 + $0x18] sm:$0xff]
    %v799 = vld [vmem:[%s3 + $0x20] sm:$0xff]
    %v800 = vld [vmem:[%s3 + $0x28] sm:$0xff]
    %v801 = vld [vmem:[%s3 + $0x30] sm:$0xff]
    %v802 = vld [vmem:[%s3 + $0x38] sm:$0xff]
    %v803 = vld [vmem:[%s3 + $0x40] sm:$0xff]
    %v804 = vld [vmem:[%s3 + $0x48] sm:$0xff]
    %v805 = vld [vmem:[%s3 + $0x50] sm:$0xff]
    %v806 = vld [vmem:[%s3 + $0x58] sm:$0xff]
    %v807 = vld [vmem:[%s3 + $0x60] sm:$0xff]
    %v808 = vld [vmem:[%s3 + $0x68] sm:$0xff]
    %v809 = vld [vmem:[%s3 + $0x70] sm:$0xff]
    %v810 = vld [vmem:[%s3 + $0x78] sm:$0xff]
    %v811 = vld [vmem:[%s4] sm:$0x3]
    %v812 = vld [vmem:[%s5] sm:$0x3]
    %v813 = vld [vmem:[%s6] sm:$0xf]
    %v814 = vld [vmem:[%s6 + $0x4] sm:$0xf]
    %v815 = vld [vmem:[%s6 + $0x8] sm:$0xf]
    %v816 = vld [vmem:[%s6 + $0xc] sm:$0xf]
    %v817 = vld [vmem:[%s6 + $0x10] sm:$0xf]
    %v818 = vld [vmem:[%s6 + $0x14] sm:$0xf]
    %v819 = vld [vmem:[%s6 + $0x18] sm:$0xf]
    %v820 = vld [vmem:[%s6 + $0x1c] sm:$0xf]
    %v821 = vld [vmem:[%s6 + $0x20] sm:$0xf]
    %v822 = vld [vmem:[%s6 + $0x24] sm:$0xf]
    %v823 = vld [vmem:[%s6 + $0x28] sm:$0xf]
    %v824 = vld [vmem:[%s6 + $0x2c] sm:$0xf]
    %v825 = vld [vmem:[%s6 + $0x30] sm:$0xf]
    %v826 = vld [vmem:[%s6 + $0x34] sm:$0xf]
    %v827 = vld [vmem:[%s6 + $0x38] sm:$0xf]
    %v828 = vld [vmem:[%s6 + $0x3c] sm:$0xf]
    %v829 = vld [vmem:[%s6 + $0x40] sm:$0xf]
    %v830 = vld [vmem:[%s6 + $0x44] sm:$0xf]
    %v831 = vld [vmem:[%s6 + $0x48] sm:$0xf]
    %v832 = vld [vmem:[%s6 + $0x4c] sm:$0xf]
    %v833 = vld [vmem:[%s6 + $0x50] sm:$0xf]
    %v834 = vld [vmem:[%s6 + $0x54] sm:$0xf]
    %v835 = vld [vmem:[%s6 + $0x58] sm:$0xf]
    %v836 = vld [vmem:[%s6 + $0x5c] sm:$0xf]
    %v837 = vld [vmem:[%s6 + $0x60] sm:$0xf]
    %v838 = vld [vmem:[%s6 + $0x64] sm:$0xf]
    %v839 = vld [vmem:[%s6 + $0x68] sm:$0xf]
    %v840 = vld [vmem:[%s6 + $0x6c] sm:$0xf]
    %v841 = vld [vmem:[%s6 + $0x70] sm:$0xf]
    %v842 = vld [vmem:[%s6 + $0x74] sm:$0xf]
    %v843 = vld [vmem:[%s6 + $0x78] sm:$0xf]
    %v844 = vld [vmem:[%s6 + $0x7c] sm:$0xf]
    %v845 = vld [vmem:[%s7] sm:$0x1]
    %v846 = vpack.c.bf16 %v789, %v789
    %v863 = vunpack.c.l.b16 %v795
    %v864 = vunpack.c.h.b16 %v795
    %v865 = vunpack.c.l.b16 %v796
    %v866 = vunpack.c.h.b16 %v796
    %v867 = vunpack.c.l.b16 %v797
    %v868 = vunpack.c.h.b16 %v797
    %v869 = vunpack.c.l.b16 %v798
    %v870 = vunpack.c.h.b16 %v798
    %v871 = vunpack.c.l.b16 %v799
    %v872 = vunpack.c.h.b16 %v799
    %v873 = vunpack.c.l.b16 %v800
    %v874 = vunpack.c.h.b16 %v800
    %v875 = vunpack.c.l.b16 %v801
    %v876 = vunpack.c.h.b16 %v801
    %v877 = vunpack.c.l.b16 %v802
    %v878 = vunpack.c.h.b16 %v802
    %v879 = vunpack.c.l.b16 %v803
    %v880 = vunpack.c.h.b16 %v803
    %v881 = vunpack.c.l.b16 %v804
    %v882 = vunpack.c.h.b16 %v804
    %v883 = vunpack.c.l.b16 %v805
    %v884 = vunpack.c.h.b16 %v805
    %v885 = vunpack.c.l.b16 %v806
    %v886 = vunpack.c.h.b16 %v806
    %v887 = vunpack.c.l.b16 %v807
    %v888 = vunpack.c.h.b16 %v807
    %v889 = vunpack.c.l.b16 %v808
    %v890 = vunpack.c.h.b16 %v808
    %v891 = vunpack.c.l.b16 %v809
    %v892 = vunpack.c.h.b16 %v809
    %v893 = vunpack.c.l.b16 %v810
    %v894 = vunpack.c.h.b16 %v810
    %v895 = vpack.c.b16 %v865, %v863
    %v896 = vpack.c.b16 %v866, %v864
    %v897 = vpack.c.b16 %v869, %v867
    %v898 = vpack.c.b16 %v870, %v868
    %v899 = vpack.c.b16 %v873, %v871
    %v900 = vpack.c.b16 %v874, %v872
    %v901 = vpack.c.b16 %v877, %v875
    %v902 = vpack.c.b16 %v878, %v876
    %v903 = vpack.c.b16 %v881, %v879
    %v904 = vpack.c.b16 %v882, %v880
    %v905 = vpack.c.b16 %v885, %v883
    %v906 = vpack.c.b16 %v886, %v884
    %v907 = vpack.c.b16 %v889, %v887
    %v908 = vpack.c.b16 %v890, %v888
    %v909 = vpack.c.b16 %v893, %v891
    %v910 = vpack.c.b16 %v894, %v892
    %927 = vmatprep.subr.bf16.mxu0 %v896
    %928 = vmatpush1.bf16.msra.mxu0 %v895
    %929 = vmatprep.subr.bf16.mxu0 %v898
    %930 = vmatpush1.bf16.msra.mxu0 %v897
    %931 = vmatprep.subr.bf16.mxu0 %v900
    %932 = vmatpush1.bf16.msra.mxu0 %v899
    %933 = vmatprep.subr.bf16.mxu0 %v902
    %934 = vmatpush1.bf16.msra.mxu0 %v901
    %935 = vmatprep.subr.bf16.mxu0 %v904
    %936 = vmatpush1.bf16.msra.mxu0 %v903
    %937 = vmatprep.subr.bf16.mxu0 %v906
    %938 = vmatpush1.bf16.msra.mxu0 %v905
    %939 = vmatprep.subr.bf16.mxu0 %v908
    %940 = vmatpush1.bf16.msra.mxu0 %v907
    %941 = vmatprep.subr.bf16.mxu0 %v910
    %942 = vmatpush1.bf16.msra.mxu0 %v909
    %943 = vmatprep.subr.bf16.mxu0 0
    %944 = vmatpush1.bf16.msra.mxu0 0
    %945 = vmatprep.subr.bf16.mxu0 0
    %946 = vmatpush1.bf16.msra.mxu0 0
    %947 = vmatprep.subr.bf16.mxu0 0
    %948 = vmatpush1.bf16.msra.mxu0 0
    %949 = vmatprep.subr.bf16.mxu0 0
    %950 = vmatpush1.bf16.msra.mxu0 0
    %951 = vmatprep.subr.bf16.mxu0 0
    %952 = vmatpush1.bf16.msra.mxu0 0
    %953 = vmatprep.subr.bf16.mxu0 0
    %954 = vmatpush1.bf16.msra.mxu0 0
    %955 = vmatprep.subr.bf16.mxu0 0
    %956 = vmatpush1.bf16.msra.mxu0 0
    %957 = vmatprep.subr.bf16.mxu0 0
    %958 = vmatpush1.bf16.msra.mxu0 0
    %959 = vmatprep.mubr.bf16.mxu0 0
    %960 = vmatmul.mubr.bf16.gmra.mrb[0].mxu0 %v846
    %v961 = vpop.f32.mrb[0].mxu0
    %v962 = vadd.f32 0.0, %v961
    %v963 = vpop.f32.mrb[0].mxu0
    %v964 = vadd.f32 0.0, %v963
    %v965 = vpop.f32.mrb[0].mxu0
    %v966 = vpop.f32.mrb[0].mxu0
    %967 = vdwg.mxu0
    %969 = vset.pattern.permute.xlu0 0
    %970 = vperm.xlu0 %969, %v89
    %v971 = vpop.permute.xlu0 %970
    %v973 = vmul.f32 %v962, %v971
    %v974 = vmul.f32 %v964, %v971
    %v975 = vrot.slane %v973, 4
    %v976 = vadd.f32 %v973, %v975
    %v977 = vrot.slane %v976, 2
    %v978 = vadd.f32 %v976, %v977
    %v979 = vrot.slane %v978, 1
    %v980 = vadd.f32 %v978, %v979
    %v981 = vrot.slane %v974, 4
    %v982 = vadd.f32 %v974, %v981
    %v983 = vrot.slane %v982, 2
    %v984 = vadd.f32 %v982, %v983
    %v985 = vrot.slane %v984, 1
    %v986 = vadd.f32 %v984, %v985
    %v987 = vmul.f32 %v973, %v962
    %v988 = vmul.f32 %v974, %v964
    %v989 = vrot.slane %v987, 4
    %v990 = vadd.f32 %v987, %v989
    %v991 = vrot.slane %v990, 2
    %v992 = vadd.f32 %v990, %v991
    %v993 = vrot.slane %v992, 1
    %v994 = vadd.f32 %v992, %v993
    %v995 = vrot.slane %v988, 4
    %v996 = vadd.f32 %v988, %v995
    %v997 = vrot.slane %v996, 2
    %v998 = vadd.f32 %v996, %v997
    %v999 = vrot.slane %v998, 1
    %v1000 = vadd.f32 %v998, %v999
    %v1001 = vmul.f32 %v980, %v980
    %v1002 = vmul.f32 %v986, %v986
    %v1003 = vsub.f32 %v994, %v1001
    %v1004 = vsub.f32 %v1000, %v1002
    %v1005 = vmax.f32 %v1003, 0.0
    %v1006 = vmax.f32 %v1004, 0.0
    %v1007 = vadd.f32 %v1005, 1e-05
    %v1008 = vadd.f32 %v1006, 1e-05
    %v1009 = vrsqrt.pop %v1007
    %v1010 = vrsqrt.pop %v1008
    %v1011 = vsub.f32 %v962, %v980
    %v1012 = vsub.f32 %v964, %v986
    %v1014 = vlaneseq
    %v1015 = vshrl.u32 %v1014, 7
    %v1016 = vsub.s32 0, %v1015
    %v1017 = vrot.slane %v811, %v1016
    %v1018 = vlaneseq
    %v1019 = vshrl.u32 %v1018, 7
    %v1020 = vsub.s32 1, %v1019
    %v1021 = vrot.slane %v811, %v1020
    %v1024 = vmul.f32 %v1009, %v1017
    %v1025 = vmul.f32 %v1010, %v1021
    %v1026 = vlaneseq
    %v1027 = vshrl.u32 %v1026, 7
    %v1028 = vsub.s32 0, %v1027
    %v1029 = vrot.slane %v1024, %v1028
    %v1030 = vlaneseq
    %v1031 = vshrl.u32 %v1030, 7
    %v1032 = vsub.s32 0, %v1031
    %v1033 = vrot.slane %v1025, %v1032
    %v1034 = vmul.f32 %v1011, %v1029
    %v1035 = vmul.f32 %v1012, %v1033
    %v1037 = vlaneseq
    %v1038 = vshrl.u32 %v1037, 7
    %v1039 = vsub.s32 0, %v1038
    %v1040 = vrot.slane %v812, %v1039
    %v1041 = vlaneseq
    %v1042 = vshrl.u32 %v1041, 7
    %v1043 = vsub.s32 1, %v1042
    %v1044 = vrot.slane %v812, %v1043
    %v1047 = vadd.f32 %v1034, %v1040
    %v1048 = vadd.f32 %v1035, %v1044
    %v1049 = vmax.f32 %v1047, 0.0
    %v1050 = vmax.f32 %v1048, 0.0
    %v1051 = vpack.c.bf16 %v1049, %v1049
    %v1052 = vpack.c.bf16 %v1050, %v1050
    %v1054 = vlaneseq
    %v1055 = vshrl.u32 %v1054, 7
    %v1056 = vsub.s32 0, %v1055
    %v1057 = vrot.slane %v845, %v1056
    %v1091 = vunpack.c.l.b16 %v813
    %v1092 = vunpack.c.l.b16 %v814
    %v1093 = vunpack.c.l.b16 %v815
    %v1094 = vunpack.c.l.b16 %v816
    %v1095 = vunpack.c.l.b16 %v817
    %v1096 = vunpack.c.l.b16 %v818
    %v1097 = vunpack.c.l.b16 %v819
    %v1098 = vunpack.c.l.b16 %v820
    %v1099 = vunpack.c.l.b16 %v821
    %v1100 = vunpack.c.l.b16 %v822
    %v1101 = vunpack.c.l.b16 %v823
    %v1102 = vunpack.c.l.b16 %v824
    %v1103 = vunpack.c.l.b16 %v825
    %v1104 = vunpack.c.l.b16 %v826
    %v1105 = vunpack.c.l.b16 %v827
    %v1106 = vunpack.c.l.b16 %v828
    %v1107 = vunpack.c.l.b16 %v829
    %v1108 = vunpack.c.l.b16 %v830
    %v1109 = vunpack.c.l.b16 %v831
    %v1110 = vunpack.c.l.b16 %v832
    %v1111 = vunpack.c.l.b16 %v833
    %v1112 = vunpack.c.l.b16 %v834
    %v1113 = vunpack.c.l.b16 %v835
    %v1114 = vunpack.c.l.b16 %v836
    %v1115 = vunpack.c.l.b16 %v837
    %v1116 = vunpack.c.l.b16 %v838
    %v1117 = vunpack.c.l.b16 %v839
    %v1118 = vunpack.c.l.b16 %v840
    %v1119 = vunpack.c.l.b16 %v841
    %v1120 = vunpack.c.l.b16 %v842
    %v1121 = vunpack.c.l.b16 %v843
    %v1122 = vunpack.c.l.b16 %v844
    %v1123 = vpack.c.b16 %v1092, %v1091
    %v1124 = vpack.c.b16 %v1094, %v1093
    %v1125 = vpack.c.b16 %v1096, %v1095
    %v1126 = vpack.c.b16 %v1098, %v1097
    %v1127 = vpack.c.b16 %v1100, %v1099
    %v1128 = vpack.c.b16 %v1102, %v1101
    %v1129 = vpack.c.b16 %v1104, %v1103
    %v1130 = vpack.c.b16 %v1106, %v1105
    %v1131 = vpack.c.b16 %v1108, %v1107
    %v1132 = vpack.c.b16 %v1110, %v1109
    %v1133 = vpack.c.b16 %v1112, %v1111
    %v1134 = vpack.c.b16 %v1114, %v1113
    %v1135 = vpack.c.b16 %v1116, %v1115
    %v1136 = vpack.c.b16 %v1118, %v1117
    %v1137 = vpack.c.b16 %v1120, %v1119
    %v1138 = vpack.c.b16 %v1122, %v1121
    %1155 = vmatprep.subr.bf16.mxu0 0
    %1156 = vmatpush1.bf16.msra.mxu0 %v1123
    %1157 = vmatprep.subr.bf16.mxu0 0
    %1158 = vmatpush1.bf16.msra.mxu0 %v1124
    %1159 = vmatprep.subr.bf16.mxu0 0
    %1160 = vmatpush1.bf16.msra.mxu0 %v1125
    %1161 = vmatprep.subr.bf16.mxu0 0
    %1162 = vmatpush1.bf16.msra.mxu0 %v1126
    %1163 = vmatprep.subr.bf16.mxu0 0
    %1164 = vmatpush1.bf16.msra.mxu0 %v1127
    %1165 = vmatprep.subr.bf16.mxu0 0
    %1166 = vmatpush1.bf16.msra.mxu0 %v1128
    %1167 = vmatprep.subr.bf16.mxu0 0
    %1168 = vmatpush1.bf16.msra.mxu0 %v1129
    %1169 = vmatprep.subr.bf16.mxu0 0
    %1170 = vmatpush1.bf16.msra.mxu0 %v1130
    %1171 = vmatprep.subr.bf16.mxu0 0
    %1172 = vmatpush1.bf16.msra.mxu0 %v1131
    %1173 = vmatprep.subr.bf16.mxu0 0
    %1174 = vmatpush1.bf16.msra.mxu0 %v1132
    %1175 = vmatprep.subr.bf16.mxu0 0
    %1176 = vmatpush1.bf16.msra.mxu0 %v1133
    %1177 = vmatprep.subr.bf16.mxu0 0
    %1178 = vmatpush1.bf16.msra.mxu0 %v1134
    %1179 = vmatprep.subr.bf16.mxu0 0
    %1180 = vmatpush1.bf16.msra.mxu0 %v1135
    %1181 = vmatprep.subr.bf16.mxu0 0
    %1182 = vmatpush1.bf16.msra.mxu0 %v1136
    %1183 = vmatprep.subr.bf16.mxu0 0
    %1184 = vmatpush1.bf16.msra.mxu0 %v1137
    %1185 = vmatprep.subr.bf16.mxu0 0
    %1186 = vmatpush1.bf16.msra.mxu0 %v1138
    %1187 = vmatprep.mubr.bf16.mxu0 %v1052
    %1188 = vmatmul.mubr.bf16.gmra.mrb[0].mxu0 %v1051
    %v1189 = vpop.f32.mrb[0].mxu0
    %v1190 = vadd.f32 %v1057, %v1189
    %v1191 = vpop.f32.mrb[0].mxu0
    %v1192 = vpop.f32.mrb[0].mxu0
    %v1193 = vpop.f32.mrb[0].mxu0
    %1194 = vdwg.mxu0
    %1195 = vst [vmem:[%s14] sm:$0xff] %v1190
    %v1196 = vld [vmem:[#allocation4] sm:$0xff]
    %v1197 = vld [vmem:[#allocation4 + $0x8] sm:$0xff]
    %v1198 = vld [vmem:[#allocation4 + $0x10] sm:$0xff]
    %v1199 = vld [vmem:[#allocation4 + $0x18] sm:$0xff]
    %v1200 = vld [vmem:[#allocation4 + $0x20] sm:$0xff]
    %v1201 = vld [vmem:[#allocation4 + $0x28] sm:$0xff]
    %v1202 = vld [vmem:[#allocation4 + $0x30] sm:$0xff]
    %v1203 = vld [vmem:[#allocation4 + $0x38] sm:$0xff]
    %v1204 = vld [vmem:[#allocation4 + $0x40] sm:$0xff]
    %v1205 = vld [vmem:[#allocation4 + $0x48] sm:$0xff]
    %v1206 = vld [vmem:[#allocation4 + $0x50] sm:$0xff]
    %v1207 = vld [vmem:[#allocation4 + $0x58] sm:$0xff]
    %v1208 = vld [vmem:[#allocation4 + $0x60] sm:$0xff]
    %v1209 = vld [vmem:[#allocation4 + $0x68] sm:$0xff]
    %v1210 = vld [vmem:[#allocation4 + $0x70] sm:$0xff]
    %v1211 = vld [vmem:[#allocation4 + $0x78] sm:$0xff]
    %v1212 = vld [vmem:[%s9] sm:$0x3]
    %v1213 = vld [vmem:[%s10] sm:$0x3]
    %v1214 = vld [vmem:[#allocation6] sm:$0xf]
    %v1215 = vld [vmem:[#allocation6 + $0x4] sm:$0xf]
    %v1216 = vld [vmem:[#allocation6 + $0x8] sm:$0xf]
    %v1217 = vld [vmem:[#allocation6 + $0xc] sm:$0xf]
    %v1218 = vld [vmem:[#allocation6 + $0x10] sm:$0xf]
    %v1219 = vld [vmem:[#allocation6 + $0x14] sm:$0xf]
    %v1220 = vld [vmem:[#allocation6 + $0x18] sm:$0xf]
    %v1221 = vld [vmem:[#allocation6 + $0x1c] sm:$0xf]
    %v1222 = vld [vmem:[#allocation6 + $0x20] sm:$0xf]
    %v1223 = vld [vmem:[#allocation6 + $0x24] sm:$0xf]
    %v1224 = vld [vmem:[#allocation6 + $0x28] sm:$0xf]
    %v1225 = vld [vmem:[#allocation6 + $0x2c] sm:$0xf]
    %v1226 = vld [vmem:[#allocation6 + $0x30] sm:$0xf]
    %v1227 = vld [vmem:[#allocation6 + $0x34] sm:$0xf]
    %v1228 = vld [vmem:[#allocation6 + $0x38] sm:$0xf]
    %v1229 = vld [vmem:[#allocation6 + $0x3c] sm:$0xf]
    %v1230 = vld [vmem:[#allocation6 + $0x40] sm:$0xf]
    %v1231 = vld [vmem:[#allocation6 + $0x44] sm:$0xf]
    %v1232 = vld [vmem:[#allocation6 + $0x48] sm:$0xf]
    %v1233 = vld [vmem:[#allocation6 + $0x4c] sm:$0xf]
    %v1234 = vld [vmem:[#allocation6 + $0x50] sm:$0xf]
    %v1235 = vld [vmem:[#allocation6 + $0x54] sm:$0xf]
    %v1236 = vld [vmem:[#allocation6 + $0x58] sm:$0xf]
    %v1237 = vld [vmem:[#allocation6 + $0x5c] sm:$0xf]
    %v1238 = vld [vmem:[#allocation6 + $0x60] sm:$0xf]
    %v1239 = vld [vmem:[#allocation6 + $0x64] sm:$0xf]
    %v1240 = vld [vmem:[#allocation6 + $0x68] sm:$0xf]
    %v1241 = vld [vmem:[#allocation6 + $0x6c] sm:$0xf]
    %v1242 = vld [vmem:[#allocation6 + $0x70] sm:$0xf]
    %v1243 = vld [vmem:[#allocation6 + $0x74] sm:$0xf]
    %v1244 = vld [vmem:[#allocation6 + $0x78] sm:$0xf]
    %v1245 = vld [vmem:[#allocation6 + $0x7c] sm:$0xf]
    %v1246 = vld [vmem:[%s12] sm:$0x1]
    %v1247 = vpack.c.bf16 %v1190, %v1190
    %v1264 = vunpack.c.l.b16 %v1196
    %v1265 = vunpack.c.h.b16 %v1196
    %v1266 = vunpack.c.l.b16 %v1197
    %v1267 = vunpack.c.h.b16 %v1197
    %v1268 = vunpack.c.l.b16 %v1198
    %v1269 = vunpack.c.h.b16 %v1198
    %v1270 = vunpack.c.l.b16 %v1199
    %v1271 = vunpack.c.h.b16 %v1199
    %v1272 = vunpack.c.l.b16 %v1200
    %v1273 = vunpack.c.h.b16 %v1200
    %v1274 = vunpack.c.l.b16 %v1201
    %v1275 = vunpack.c.h.b16 %v1201
    %v1276 = vunpack.c.l.b16 %v1202
    %v1277 = vunpack.c.h.b16 %v1202
    %v1278 = vunpack.c.l.b16 %v1203
    %v1279 = vunpack.c.h.b16 %v1203
    %v1280 = vunpack.c.l.b16 %v1204
    %v1281 = vunpack.c.h.b16 %v1204
    %v1282 = vunpack.c.l.b16 %v1205
    %v1283 = vunpack.c.h.b16 %v1205
    %v1284 = vunpack.c.l.b16 %v1206
    %v1285 = vunpack.c.h.b16 %v1206
    %v1286 = vunpack.c.l.b16 %v1207
    %v1287 = vunpack.c.h.b16 %v1207
    %v1288 = vunpack.c.l.b16 %v1208
    %v1289 = vunpack.c.h.b16 %v1208
    %v1290 = vunpack.c.l.b16 %v1209
    %v1291 = vunpack.c.h.b16 %v1209
    %v1292 = vunpack.c.l.b16 %v1210
    %v1293 = vunpack.c.h.b16 %v1210
    %v1294 = vunpack.c.l.b16 %v1211
    %v1295 = vunpack.c.h.b16 %v1211
    %v1296 = vpack.c.b16 %v1266, %v1264
    %v1297 = vpack.c.b16 %v1267, %v1265
    %v1298 = vpack.c.b16 %v1270, %v1268
    %v1299 = vpack.c.b16 %v1271, %v1269
    %v1300 = vpack.c.b16 %v1274, %v1272
    %v1301 = vpack.c.b16 %v1275, %v1273
    %v1302 = vpack.c.b16 %v1278, %v1276
    %v1303 = vpack.c.b16 %v1279, %v1277
    %v1304 = vpack.c.b16 %v1282, %v1280
    %v1305 = vpack.c.b16 %v1283, %v1281
    %v1306 = vpack.c.b16 %v1286, %v1284
    %v1307 = vpack.c.b16 %v1287, %v1285
    %v1308 = vpack.c.b16 %v1290, %v1288
    %v1309 = vpack.c.b16 %v1291, %v1289
    %v1310 = vpack.c.b16 %v1294, %v1292
    %v1311 = vpack.c.b16 %v1295, %v1293
    %1328 = vmatprep.subr.bf16.mxu0 %v1297
    %1329 = vmatpush1.bf16.msra.mxu0 %v1296
    %1330 = vmatprep.subr.bf16.mxu0 %v1299
    %1331 = vmatpush1.bf16.msra.mxu0 %v1298
    %1332 = vmatprep.subr.bf16.mxu0 %v1301
    %1333 = vmatpush1.bf16.msra.mxu0 %v1300
    %1334 = vmatprep.subr.bf16.mxu0 %v1303
    %1335 = vmatpush1.bf16.msra.mxu0 %v1302
    %1336 = vmatprep.subr.bf16.mxu0 %v1305
    %1337 = vmatpush1.bf16.msra.mxu0 %v1304
    %1338 = vmatprep.subr.bf16.mxu0 %v1307
    %1339 = vmatpush1.bf16.msra.mxu0 %v1306
    %1340 = vmatprep.subr.bf16.mxu0 %v1309
    %1341 = vmatpush1.bf16.msra.mxu0 %v1308
    %1342 = vmatprep.subr.bf16.mxu0 %v1311
    %1343 = vmatpush1.bf16.msra.mxu0 %v1310
    %1344 = vmatprep.subr.bf16.mxu0 0
    %1345 = vmatpush1.bf16.msra.mxu0 0
    %1346 = vmatprep.subr.bf16.mxu0 0
    %1347 = vmatpush1.bf16.msra.mxu0 0
    %1348 = vmatprep.subr.bf16.mxu0 0
    %1349 = vmatpush1.bf16.msra.mxu0 0
    %1350 = vmatprep.subr.bf16.mxu0 0
    %1351 = vmatpush1.bf16.msra.mxu0 0
    %1352 = vmatprep.subr.bf16.mxu0 0
    %1353 = vmatpush1.bf16.msra.mxu0 0
    %1354 = vmatprep.subr.bf16.mxu0 0
    %1355 = vmatpush1.bf16.msra.mxu0 0
    %1356 = vmatprep.subr.bf16.mxu0 0
    %1357 = vmatpush1.bf16.msra.mxu0 0
    %1358 = vmatprep.subr.bf16.mxu0 0
    %1359 = vmatpush1.bf16.msra.mxu0 0
    %1360 = vmatprep.mubr.bf16.mxu0 0
    %1361 = vmatmul.mubr.bf16.gmra.mrb[0].mxu0 %v1247
    %v1362 = vpop.f32.mrb[0].mxu0
    %v1363 = vadd.f32 0.0, %v1362
    %v1364 = vpop.f32.mrb[0].mxu0
    %v1365 = vadd.f32 0.0, %v1364
    %v1366 = vpop.f32.mrb[0].mxu0
    %v1367 = vpop.f32.mrb[0].mxu0
    %1368 = vdwg.mxu0
    %v1369 = vmul.f32 %v1363, %v971
    %v1370 = vmul.f32 %v1365, %v971
    %v1371 = vrot.slane %v1369, 4
    %v1372 = vadd.f32 %v1369, %v1371
    %v1373 = vrot.slane %v1372, 2
    %v1374 = vadd.f32 %v1372, %v1373
    %v1375 = vrot.slane %v1374, 1
    %v1376 = vadd.f32 %v1374, %v1375
    %v1377 = vrot.slane %v1370, 4
    %v1378 = vadd.f32 %v1370, %v1377
    %v1379 = vrot.slane %v1378, 2
    %v1380 = vadd.f32 %v1378, %v1379
    %v1381 = vrot.slane %v1380, 1
    %v1382 = vadd.f32 %v1380, %v1381
    %v1383 = vmul.f32 %v1369, %v1363
    %v1384 = vmul.f32 %v1370, %v1365
    %v1385 = vrot.slane %v1383, 4
    %v1386 = vadd.f32 %v1383, %v1385
    %v1387 = vrot.slane %v1386, 2
    %v1388 = vadd.f32 %v1386, %v1387
    %v1389 = vrot.slane %v1388, 1
    %v1390 = vadd.f32 %v1388, %v1389
    %v1391 = vrot.slane %v1384, 4
    %v1392 = vadd.f32 %v1384, %v1391
    %v1393 = vrot.slane %v1392, 2
    %v1394 = vadd.f32 %v1392, %v1393
    %v1395 = vrot.slane %v1394, 1
    %v1396 = vadd.f32 %v1394, %v1395
    %v1397 = vmul.f32 %v1376, %v1376
    %v1398 = vmul.f32 %v1382, %v1382
    %v1399 = vsub.f32 %v1390, %v1397
    %v1400 = vsub.f32 %v1396, %v1398
    %v1401 = vmax.f32 %v1399, 0.0
    %v1402 = vmax.f32 %v1400, 0.0
    %v1403 = vadd.f32 %v1401, 1e-05
    %v1404 = vadd.f32 %v1402, 1e-05
    %v1405 = vrsqrt.pop %v1403
    %v1406 = vrsqrt.pop %v1404
    %v1407 = vsub.f32 %v1363, %v1376
    %v1408 = vsub.f32 %v1365, %v1382
    %v1410 = vlaneseq
    %v1411 = vshrl.u32 %v1410, 7
    %v1412 = vsub.s32 0, %v1411
    %v1413 = vrot.slane %v1212, %v1412
    %v1414 = vlaneseq
    %v1415 = vshrl.u32 %v1414, 7
    %v1416 = vsub.s32 1, %v1415
    %v1417 = vrot.slane %v1212, %v1416
    %v1420 = vmul.f32 %v1405, %v1413
    %v1421 = vmul.f32 %v1406, %v1417
    %v1422 = vlaneseq
    %v1423 = vshrl.u32 %v1422, 7
    %v1424 = vsub.s32 0, %v1423
    %v1425 = vrot.slane %v1420, %v1424
    %v1426 = vlaneseq
    %v1427 = vshrl.u32 %v1426, 7
    %v1428 = vsub.s32 0, %v1427
    %v1429 = vrot.slane %v1421, %v1428
    %v1430 = vmul.f32 %v1407, %v1425
    %v1431 = vmul.f32 %v1408, %v1429
    %v1433 = vlaneseq
    %v1434 = vshrl.u32 %v1433, 7
    %v1435 = vsub.s32 0, %v1434
    %v1436 = vrot.slane %v1213, %v1435
    %v1437 = vlaneseq
    %v1438 = vshrl.u32 %v1437, 7
    %v1439 = vsub.s32 1, %v1438
    %v1440 = vrot.slane %v1213, %v1439
    %v1443 = vadd.f32 %v1430, %v1436
    %v1444 = vadd.f32 %v1431, %v1440
    %v1445 = vmax.f32 %v1443, 0.0
    %v1446 = vmax.f32 %v1444, 0.0
    %v1447 = vpack.c.bf16 %v1445, %v1445
    %v1448 = vpack.c.bf16 %v1446, %v1446
    %v1450 = vlaneseq
    %v1451 = vshrl.u32 %v1450, 7
    %v1452 = vsub.s32 0, %v1451
    %v1453 = vrot.slane %v1246, %v1452
    %v1487 = vunpack.c.l.b16 %v1214
    %v1488 = vunpack.c.l.b16 %v1215
    %v1489 = vunpack.c.l.b16 %v1216
    %v1490 = vunpack.c.l.b16 %v1217
    %v1491 = vunpack.c.l.b16 %v1218
    %v1492 = vunpack.c.l.b16 %v1219
    %v1493 = vunpack.c.l.b16 %v1220
    %v1494 = vunpack.c.l.b16 %v1221
    %v1495 = vunpack.c.l.b16 %v1222
    %v1496 = vunpack.c.l.b16 %v1223
    %v1497 = vunpack.c.l.b16 %v1224
    %v1498 = vunpack.c.l.b16 %v1225
    %v1499 = vunpack.c.l.b16 %v1226
    %v1500 = vunpack.c.l.b16 %v1227
    %v1501 = vunpack.c.l.b16 %v1228
    %v1502 = vunpack.c.l.b16 %v1229
    %v1503 = vunpack.c.l.b16 %v1230
    %v1504 = vunpack.c.l.b16 %v1231
    %v1505 = vunpack.c.l.b16 %v1232
    %v1506 = vunpack.c.l.b16 %v1233
    %v1507 = vunpack.c.l.b16 %v1234
    %v1508 = vunpack.c.l.b16 %v1235
    %v1509 = vunpack.c.l.b16 %v1236
    %v1510 = vunpack.c.l.b16 %v1237
    %v1511 = vunpack.c.l.b16 %v1238
    %v1512 = vunpack.c.l.b16 %v1239
    %v1513 = vunpack.c.l.b16 %v1240
    %v1514 = vunpack.c.l.b16 %v1241
    %v1515 = vunpack.c.l.b16 %v1242
    %v1516 = vunpack.c.l.b16 %v1243
    %v1517 = vunpack.c.l.b16 %v1244
    %v1518 = vunpack.c.l.b16 %v1245
    %v1519 = vpack.c.b16 %v1488, %v1487
    %v1520 = vpack.c.b16 %v1490, %v1489
    %v1521 = vpack.c.b16 %v1492, %v1491
    %v1522 = vpack.c.b16 %v1494, %v1493
    %v1523 = vpack.c.b16 %v1496, %v1495
    %v1524 = vpack.c.b16 %v1498, %v1497
    %v1525 = vpack.c.b16 %v1500, %v1499
    %v1526 = vpack.c.b16 %v1502, %v1501
    %v1527 = vpack.c.b16 %v1504, %v1503
    %v1528 = vpack.c.b16 %v1506, %v1505
    %v1529 = vpack.c.b16 %v1508, %v1507
    %v1530 = vpack.c.b16 %v1510, %v1509
    %v1531 = vpack.c.b16 %v1512, %v1511
    %v1532 = vpack.c.b16 %v1514, %v1513
    %v1533 = vpack.c.b16 %v1516, %v1515
    %v1534 = vpack.c.b16 %v1518, %v1517
    %1551 = vmatprep.subr.bf16.mxu0 0
    %1552 = vmatpush1.bf16.msra.mxu0 %v1519
    %1553 = vmatprep.subr.bf16.mxu0 0
    %1554 = vmatpush1.bf16.msra.mxu0 %v1520
    %1555 = vmatprep.subr.bf16.mxu0 0
    %1556 = vmatpush1.bf16.msra.mxu0 %v1521
    %1557 = vmatprep.subr.bf16.mxu0 0
    %1558 = vmatpush1.bf16.msra.mxu0 %v1522
    %1559 = vmatprep.subr.bf16.mxu0 0
    %1560 = vmatpush1.bf16.msra.mxu0 %v1523
    %1561 = vmatprep.subr.bf16.mxu0 0
    %1562 = vmatpush1.bf16.msra.mxu0 %v1524
    %1563 = vmatprep.subr.bf16.mxu0 0
    %1564 = vmatpush1.bf16.msra.mxu0 %v1525
    %1565 = vmatprep.subr.bf16.mxu0 0
    %1566 = vmatpush1.bf16.msra.mxu0 %v1526
    %1567 = vmatprep.subr.bf16.mxu0 0
    %1568 = vmatpush1.bf16.msra.mxu0 %v1527
    %1569 = vmatprep.subr.bf16.mxu0 0
    %1570 = vmatpush1.bf16.msra.mxu0 %v1528
    %1571 = vmatprep.subr.bf16.mxu0 0
    %1572 = vmatpush1.bf16.msra.mxu0 %v1529
    %1573 = vmatprep.subr.bf16.mxu0 0
    %1574 = vmatpush1.bf16.msra.mxu0 %v1530
    %1575 = vmatprep.subr.bf16.mxu0 0
    %1576 = vmatpush1.bf16.msra.mxu0 %v1531
    %1577 = vmatprep.subr.bf16.mxu0 0
    %1578 = vmatpush1.bf16.msra.mxu0 %v1532
    %1579 = vmatprep.subr.bf16.mxu0 0
    %1580 = vmatpush1.bf16.msra.mxu0 %v1533
    %1581 = vmatprep.subr.bf16.mxu0 0
    %1582 = vmatpush1.bf16.msra.mxu0 %v1534
    %1583 = vmatprep.mubr.bf16.mxu0 %v1448
    %1584 = vmatmul.mubr.bf16.gmra.mrb[0].mxu0 %v1447
    %v1585 = vpop.f32.mrb[0].mxu0
    %v1586 = vadd.f32 %v1453, %v1585
    %v1587 = vpop.f32.mrb[0].mxu0
    %v1588 = vpop.f32.mrb[0].mxu0
    %v1589 = vpop.f32.mrb[0].mxu0
    %1590 = vdwg.mxu0
    %1591 = vst [vmem:[%s15] sm:$0xff] %v1586
    // Predicated region
    $region66: #{siamese_arm_forward.1} parent=1 // pred_check
      _
    $region67: #{siamese_arm_forward.1} parent=1 // pred_check_branch
      %1593 = sbr.rel (0) target = $region69
    $region68: #{siamese_arm_forward.1} parent=1 // pred_region
      _
    $region69: #{siamese_arm_forward.1} parent=1 // pred_fallthru
      _
    // Predicated region
    $region70: #{siamese_arm_forward.1} parent=1 // pred_check
      _
    $region71: #{siamese_arm_forward.1} parent=1 // pred_check_branch
      %1595 = sbr.rel (0) target = $region73
    $region72: #{siamese_arm_forward.1} parent=1 // pred_region
      _
    $region73: #{siamese_arm_forward.1} parent=1 // pred_fallthru
      _
    // Predicated region
    $region74: #{siamese_arm_forward.1} parent=1 // pred_check
      _
    $region75: #{siamese_arm_forward.1} parent=1 // pred_check_branch
      %1597 = sbr.rel (0) target = $region77
    $region76: #{siamese_arm_forward.1} parent=1 // pred_region
      _
    $region77: #{siamese_arm_forward.1} parent=1 // pred_fallthru
      _
    // Predicated region
    $region78: #{siamese_arm_forward.1} parent=1 // pred_check
      _
    $region79: #{siamese_arm_forward.1} parent=1 // pred_check_branch
      %1599 = sbr.rel (0) target = $region81
    $region80: #{siamese_arm_forward.1} parent=1 // pred_region
      _
    $region81: #{siamese_arm_forward.1} parent=1 // pred_fallthru
      _
    // Predicated region
    $region82: #{siamese_arm_forward.1} parent=1 // pred_check
      _
    $region83: #{siamese_arm_forward.1} parent=1 // pred_check_branch
      %1601 = sbr.rel (0) target = $region85
    $region84: #{siamese_arm_forward.1} parent=1 // pred_region
      _
    $region85: #{siamese_arm_forward.1} parent=1 // pred_fallthru
      _
    // Predicated region
    $region86: #{siamese_arm_forward.1} parent=1 // pred_check
      _
    $region87: #{siamese_arm_forward.1} parent=1 // pred_check_branch
      %1603 = sbr.rel (0) target = $region89
    $region88: #{siamese_arm_forward.1} parent=1 // pred_region
      _
    $region89: #{siamese_arm_forward.1} parent=1 // pred_fallthru
      _
    %1604 = vsyncpa [#allocation3], 1
    %1605 = vsyncpa [#allocation5], 1

</llo_original>
